<compile_context>
chip_gen: v7x
topology: tpu7x:2x2x1
jax: 0.10.0
libtpu: 0.0.40
codegen_flags: <defaults>
</compile_context>

<pallas_src>
import jax
import jax.numpy as jnp
from jax import lax
from jax.experimental import pallas as pl
from jax.experimental.pallas import tpu as pltpu


# ----------------------------------------------------------------------------
# Kernel
# ----------------------------------------------------------------------------
def lstm_classifier_kernel(emb_ref, wih_ref, whh_ref, b_ref, wfc_ref, bfc_ref,
                           out_ref, h_ref, c_ref):
    """One (batch-block, time-chunk) grid step of the LSTM classifier.

    emb_ref : (T_blk, B_blk, Ep)  bf16  time-major embedded tokens (chunk)
    wih_ref : (Ep, 4*Hp)          bf16  input->gates weights ([i|f|g|o])
    whh_ref : (Hp, 4*Hp)          bf16  hidden->gates weights
    b_ref   : (1, 4*Hp)           f32   combined bias (b_ih + b_hh)
    wfc_ref : (Hp, Cp)            bf16  classifier weights
    bfc_ref : (1, Cp)             f32   classifier bias
    out_ref : (B_blk, Cp)         f32   logits (written on last time chunk)
    h_ref   : (B_blk, Hp)         f32   hidden-state carry (VMEM scratch)
    c_ref   : (B_blk, Hp)         f32   cell-state carry   (VMEM scratch)
    """
    t_idx = pl.program_id(1)
    n_t = pl.num_programs(1)

    T_blk, B_blk, Ep = emb_ref.shape
    Hp = whh_ref.shape[0]

    @pl.when(t_idx == 0)
    def _init():
        h_ref[...] = jnp.zeros_like(h_ref)
        c_ref[...] = jnp.zeros_like(c_ref)

    # ---- hoisted input projection: ONE well-shaped MXU matmul + bias -------
    x = emb_ref[...].reshape(T_blk * B_blk, Ep)                    # bf16
    x_proj = (jnp.dot(x, wih_ref[...], preferred_element_type=jnp.float32)
              + b_ref[...])                                        # f32
    x_proj = x_proj.reshape(T_blk, B_blk, 4 * Hp)

    whh = whh_ref[...]                                             # bf16

    h = h_ref[...]
    c = c_ref[...]

    # ---- recurrence: fully unrolled over the (small, static) time chunk ----
    # The T grid axis bounds the trip count; gate math stays in f32.
    for t in range(T_blk):
        gates = x_proj[t] + jnp.dot(h.astype(whh.dtype), whh,
                                    preferred_element_type=jnp.float32)
        i = jax.nn.sigmoid(gates[:, 0 * Hp:1 * Hp])
        f = jax.nn.sigmoid(gates[:, 1 * Hp:2 * Hp])
        g = jnp.tanh(gates[:, 2 * Hp:3 * Hp])
        o = jax.nn.sigmoid(gates[:, 3 * Hp:4 * Hp])
        c = f * c + i * g
        h = o * jnp.tanh(c)

    h_ref[...] = h
    c_ref[...] = c

    # ---- final classifier on the last hidden state --------------------------
    @pl.when(t_idx == n_t - 1)
    def _finalize():
        out_ref[...] = (jnp.dot(h.astype(wfc_ref.dtype), wfc_ref[...],
                                preferred_element_type=jnp.float32)
                        + bfc_ref[...])


# ----------------------------------------------------------------------------
# Wrapper
# ----------------------------------------------------------------------------
def _round_up(x, m):
    return ((x + m - 1) // m) * m


def _largest_divisor_leq(n, cap):
    for c in range(min(n, cap), 0, -1):
        if n % c == 0:
            return c
    return 1


def simple_text_classifier(tokens, params):
    """tokens: (B, T) int32.  Returns logits (B, num_classes) float32."""
    emb_table = params["embedding"]        # (V, E)
    w_ih = params["w_ih"]                  # (4H, E)   PyTorch layout
    w_hh = params["w_hh"]                  # (4H, H)
    b_ih = params["b_ih"]                  # (4H,)
    b_hh = params["b_hh"]                  # (4H,)
    w_fc = params["w_fc"]                  # (C, H)
    b_fc = params["b_fc"]                  # (C,)

    B, T = tokens.shape
    V, E = emb_table.shape
    H = w_hh.shape[1]
    C = w_fc.shape[0]

    # ---- pad everything to lane/sublane-dense TPU shapes --------------------
    Ep = _round_up(E, 128)
    Hp = _round_up(H, 128)
    Cp = _round_up(C, 128)
    B_blk = min(_round_up(B, 16), 128)     # batch tile (parallel grid axis)
    Bp = _round_up(B, B_blk)
    T_blk = _largest_divisor_leq(T, 16)    # time chunk (arbitrary grid axis)

    def pack_gates_t(w, in_dim, in_pad):
        # w: (4H, in_dim) -> (in_pad, 4*Hp), column blocks [i|f|g|o] of width Hp
        wg = w.reshape(4, H, in_dim).transpose(0, 2, 1)       # (4, in, H)
        wg = jnp.pad(wg, ((0, 0), (0, in_pad - in_dim), (0, Hp - H)))
        return wg.transpose(1, 0, 2).reshape(in_pad, 4 * Hp)

    wih_t = pack_gates_t(w_ih, E, Ep).astype(jnp.bfloat16)
    whh_t = pack_gates_t(w_hh, H, Hp).astype(jnp.bfloat16)
    b_gates = jnp.pad((b_ih + b_hh).reshape(4, H), ((0, 0), (0, Hp - H)))
    b_gates = b_gates.reshape(1, 4 * Hp).astype(jnp.float32)

    wfc_t = jnp.pad(w_fc.T, ((0, Hp - H), (0, Cp - C))).astype(jnp.bfloat16)
    bfc = jnp.pad(b_fc, (0, Cp - C)).reshape(1, Cp).astype(jnp.float32)

    # Embedding gather (XLA glue), time-major, padded, bf16.
    # TODO(synk): gather embedding rows inside the kernel via scalar-prefetch
    # DMA to avoid the HBM round-trip of the embedded slab.
    emb_pad = jnp.pad(emb_table, ((0, 0), (0, Ep - E))).astype(jnp.bfloat16)
    tok = jnp.pad(tokens, ((0, Bp - B), (0, 0)))
    embedded = jnp.take(emb_pad, tok, axis=0)          # (Bp, T, Ep)
    embedded = jnp.transpose(embedded, (1, 0, 2))      # (T, Bp, Ep)

    grid = (Bp // B_blk, T // T_blk)

    cost = pl.CostEstimate(
        flops=2 * T * Bp * (Ep + Hp) * 4 * Hp + 2 * Bp * Hp * Cp,
        transcendentals=5 * T * Bp * Hp,
        bytes_accessed=(embedded.size * 2 + wih_t.size * 2 + whh_t.size * 2
                        + wfc_t.size * 2 + b_gates.size * 4 + bfc.size * 4
                        + Bp * Cp * 4),
    )

    out = pl.pallas_call(
        lstm_classifier_kernel,
        out_shape=jax.ShapeDtypeStruct((Bp, Cp), jnp.float32),
        grid_spec=pltpu.PrefetchScalarGridSpec(
            num_scalar_prefetch=0,
            grid=grid,
            in_specs=[
                pl.BlockSpec((T_blk, B_blk, Ep), lambda b, t: (t, b, 0)),
                pl.BlockSpec((Ep, 4 * Hp), lambda b, t: (0, 0)),
                pl.BlockSpec((Hp, 4 * Hp), lambda b, t: (0, 0)),
                pl.BlockSpec((1, 4 * Hp), lambda b, t: (0, 0)),
                pl.BlockSpec((Hp, Cp), lambda b, t: (0, 0)),
                pl.BlockSpec((1, Cp), lambda b, t: (0, 0)),
            ],
            out_specs=pl.BlockSpec((B_blk, Cp), lambda b, t: (b, 0)),
            scratch_shapes=[pltpu.VMEM((B_blk, Hp), jnp.float32),
                            pltpu.VMEM((B_blk, Hp), jnp.float32)],
        ),
        compiler_params=pltpu.CompilerParams(
            dimension_semantics=("parallel", "arbitrary"),
            vmem_limit_bytes=32 * 1024 * 1024,
        ),
        cost_estimate=cost,
    )(embedded, wih_t, whh_t, b_gates, wfc_t, bfc)

    return out[:B, :C]


# ----------------------------------------------------------------------------
# Params / reference
# ----------------------------------------------------------------------------
def init_params(key, vocab_size, embed_size, hidden_size, num_classes):
    k = jax.random.split(key, 7)
    s = 0.1
    return {
        "embedding": jax.random.normal(k[0], (vocab_size, embed_size), jnp.float32) * s,
        "w_ih": jax.random.normal(k[1], (4 * hidden_size, embed_size), jnp.float32) * s,
        "w_hh": jax.random.normal(k[2], (4 * hidden_size, hidden_size), jnp.float32) * s,
        "b_ih": jax.random.normal(k[3], (4 * hidden_size,), jnp.float32) * s,
        "b_hh": jax.random.normal(k[4], (4 * hidden_size,), jnp.float32) * s,
        "w_fc": jax.random.normal(k[5], (num_classes, hidden_size), jnp.float32) * s,
        "b_fc": jax.random.normal(k[6], (num_classes,), jnp.float32) * s,
    }


def reference_forward(tokens, params):
    """Pure-JAX f32 reference matching PyTorch semantics."""
    emb = jnp.take(params["embedding"], tokens, axis=0)    # (B, T, E)
    H = params["w_hh"].shape[1]
    w_ih, w_hh = params["w_ih"], params["w_hh"]
    bias = params["b_ih"] + params["b_hh"]
    B, T = tokens.shape
    h = jnp.zeros((B, H), jnp.float32)
    c = jnp.zeros((B, H), jnp.float32)
    for t in range(T):
        gates = emb[:, t, :] @ w_ih.T + h @ w_hh.T + bias
        i = jax.nn.sigmoid(gates[:, 0 * H:1 * H])
        f = jax.nn.sigmoid(gates[:, 1 * H:2 * H])
        g = jnp.tanh(gates[:, 2 * H:3 * H])
        o = jax.nn.sigmoid(gates[:, 3 * H:4 * H])
        c = f * c + i * g
        h = o * jnp.tanh(c)
    return h @ params["w_fc"].T + params["b_fc"]


if __name__ == "__main__":
    vocab_size, embed_size, hidden_size, num_classes = 50, 32, 32, 4
    B, T = 2, 8

    key = jax.random.PRNGKey(0)
    kp, kx = jax.random.split(key)
    params = init_params(kp, vocab_size, embed_size, hidden_size, num_classes)
    tokens = jax.random.randint(kx, (B, T), 0, vocab_size, dtype=jnp.int32)

    logits = jax.jit(simple_text_classifier)(tokens, params)
    jax.block_until_ready(logits)
    assert logits.shape == (B, num_classes)

    ref = reference_forward(tokens, params)
    max_err = float(jnp.max(jnp.abs(logits - ref)))
    assert jnp.allclose(logits, ref, atol=5e-2, rtol=5e-2), max_err

    print("KERNEL_OK")
</pallas_src>

<mosaic_0001>
module attributes {stable_mosaic.version = 11 : i64} {
  func.func @lstm_classifier_kernel(%arg0: i32, %arg1: i32, %arg2: memref<8x16x128xbf16, #tpu.memory_space<vmem>>, %arg3: memref<128x512xbf16, #tpu.memory_space<vmem>>, %arg4: memref<128x512xbf16, #tpu.memory_space<vmem>>, %arg5: memref<1x512xf32, #tpu.memory_space<vmem>>, %arg6: memref<128x128xbf16, #tpu.memory_space<vmem>>, %arg7: memref<1x128xf32, #tpu.memory_space<vmem>>, %arg8: memref<16x128xf32, #tpu.memory_space<vmem>>, %arg9: memref<16x128xf32, #tpu.memory_space<vmem>>, %arg10: memref<16x128xf32, #tpu.memory_space<vmem>>) attributes {dimension_semantics = [#tpu.dimension_semantics<parallel>, #tpu.dimension_semantics<arbitrary>], iteration_bounds = array<i64: 1, 1>, scalar_prefetch = 0 : i64, scratch_operands = 2 : i64, tpu.core_type = #tpu.core_type<tc>, window_params = [{transform_indices = @transform_0, window_bounds = array<i64: 8, 16, 128>}, {pipeline_mode = #tpu.pipeline_mode<synchronous>, transform_indices = @transform_1, window_bounds = array<i64: 128, 512>}, {pipeline_mode = #tpu.pipeline_mode<synchronous>, transform_indices = @transform_2, window_bounds = array<i64: 128, 512>}, {pipeline_mode = #tpu.pipeline_mode<synchronous>, transform_indices = @transform_3, window_bounds = array<i64: 1, 512>}, {pipeline_mode = #tpu.pipeline_mode<synchronous>, transform_indices = @transform_4, window_bounds = array<i64: 128, 128>}, {pipeline_mode = #tpu.pipeline_mode<synchronous>, transform_indices = @transform_5, window_bounds = array<i64: 1, 128>}, {transform_indices = @transform_6, window_bounds = array<i64: 16, 128>}]} {
    %c0_i32 = arith.constant 0 : i32
    %0 = arith.cmpi eq, %arg1, %c0_i32 : i32
    %1 = arith.extui %0 : i1 to i32
    %c0_i32_0 = arith.constant 0 : i32
    %2 = arith.cmpi ne, %1, %c0_i32_0 : i32
    scf.if %2 {
      %cst_51 = arith.constant 0.000000e+00 : f32
      %259 = vector.broadcast %cst_51 : f32 to vector<16x128xf32>
      %c0_52 = arith.constant 0 : index
      %c0_53 = arith.constant 0 : index
      %260 = vector.load %arg9[%c0_52, %c0_53] : memref<16x128xf32, #tpu.memory_space<vmem>>, vector<16x128xf32>
      tpu.vector_store %arg9[%c0_52, %c0_53], %259 {strides = array<i32>} : memref<16x128xf32, #tpu.memory_space<vmem>>, vector<16x128xf32>,
      %cst_54 = arith.constant 0.000000e+00 : f32
      %261 = vector.broadcast %cst_54 : f32 to vector<16x128xf32>
      %c0_55 = arith.constant 0 : index
      %c0_56 = arith.constant 0 : index
      %262 = vector.load %arg10[%c0_55, %c0_56] : memref<16x128xf32, #tpu.memory_space<vmem>>, vector<16x128xf32>
      tpu.vector_store %arg10[%c0_55, %c0_56], %261 {strides = array<i32>} : memref<16x128xf32, #tpu.memory_space<vmem>>, vector<16x128xf32>,
    } else {
    }
    %c0 = arith.constant 0 : index
    %c0_1 = arith.constant 0 : index
    %c0_2 = arith.constant 0 : index
    %3 = vector.load %arg2[%c0, %c0_1, %c0_2] : memref<8x16x128xbf16, #tpu.memory_space<vmem>>, vector<8x16x128xbf16>
    %4 = vector.shape_cast %3 : vector<8x16x128xbf16> to vector<128x128xbf16>
    %c0_3 = arith.constant 0 : index
    %c0_4 = arith.constant 0 : index
    %5 = vector.load %arg3[%c0_3, %c0_4] : memref<128x512xbf16, #tpu.memory_space<vmem>>, vector<128x512xbf16>
    %cst = arith.constant dense<0.000000e+00> : vector<128x512xf32>
    %6 = tpu.matmul %4, %5, %cst {dimension_numbers = #tpu.dot_dimension_numbers<[1], [0], [0], [1], [0, 0, 1, 1], [], []>} : vector<128x128xbf16>, vector<128x512xbf16>, vector<128x512xf32> -> vector<128x512xf32>
    %c0_5 = arith.constant 0 : index
    %c0_6 = arith.constant 0 : index
    %7 = vector.load %arg5[%c0_5, %c0_6] : memref<1x512xf32, #tpu.memory_space<vmem>>, vector<1x512xf32>
    %8 = vector.broadcast %7 : vector<1x512xf32> to vector<128x512xf32>
    %9 = arith.addf %6, %8 : vector<128x512xf32>
    %10 = vector.shape_cast %9 : vector<128x512xf32> to vector<8x16x512xf32>
    %c0_7 = arith.constant 0 : index
    %c0_8 = arith.constant 0 : index
    %11 = vector.load %arg4[%c0_7, %c0_8] : memref<128x512xbf16, #tpu.memory_space<vmem>>, vector<128x512xbf16>
    %c0_9 = arith.constant 0 : index
    %c0_10 = arith.constant 0 : index
    %12 = vector.load %arg9[%c0_9, %c0_10] : memref<16x128xf32, #tpu.memory_space<vmem>>, vector<16x128xf32>
    %c0_11 = arith.constant 0 : index
    %c0_12 = arith.constant 0 : index
    %13 = vector.load %arg10[%c0_11, %c0_12] : memref<16x128xf32, #tpu.memory_space<vmem>>, vector<16x128xf32>
    %14 = vector.extract_strided_slice %10 {offsets = [0, 0, 0], sizes = [1, 16, 512], strides = [1, 1, 1]} : vector<8x16x512xf32> to vector<1x16x512xf32>
    %15 = vector.shape_cast %14 : vector<1x16x512xf32> to vector<16x512xf32>
    %16 = arith.truncf %12 : vector<16x128xf32> to vector<16x128xbf16>
    %cst_13 = arith.constant dense<0.000000e+00> : vector<16x512xf32>
    %17 = tpu.matmul %16, %11, %cst_13 {dimension_numbers = #tpu.dot_dimension_numbers<[1], [0], [0], [1], [0, 0, 1, 1], [], []>} : vector<16x128xbf16>, vector<128x512xbf16>, vector<16x512xf32> -> vector<16x512xf32>
    %18 = arith.addf %15, %17 : vector<16x512xf32>
    %19 = vector.extract_strided_slice %18 {offsets = [0, 0], sizes = [16, 128], strides = [1, 1]} : vector<16x512xf32> to vector<16x128xf32>
    %20 = arith.negf %19 : vector<16x128xf32>
    %21 = math.exp %20 : vector<16x128xf32>
    %cst_14 = arith.constant 1.000000e+00 : f32
    %22 = vector.broadcast %cst_14 : f32 to vector<16x128xf32>
    %23 = arith.addf %22, %21 : vector<16x128xf32>
    %24 = arith.divf %22, %23 : vector<16x128xf32>
    %25 = vector.extract_strided_slice %18 {offsets = [0, 128], sizes = [16, 128], strides = [1, 1]} : vector<16x512xf32> to vector<16x128xf32>
    %26 = arith.negf %25 : vector<16x128xf32>
    %27 = math.exp %26 : vector<16x128xf32>
    %cst_15 = arith.constant 1.000000e+00 : f32
    %28 = vector.broadcast %cst_15 : f32 to vector<16x128xf32>
    %29 = arith.addf %28, %27 : vector<16x128xf32>
    %30 = arith.divf %28, %29 : vector<16x128xf32>
    %31 = vector.extract_strided_slice %18 {offsets = [0, 256], sizes = [16, 128], strides = [1, 1]} : vector<16x512xf32> to vector<16x128xf32>
    %32 = math.tanh %31 : vector<16x128xf32>
    %33 = vector.extract_strided_slice %18 {offsets = [0, 384], sizes = [16, 128], strides = [1, 1]} : vector<16x512xf32> to vector<16x128xf32>
    %34 = arith.negf %33 : vector<16x128xf32>
    %35 = math.exp %34 : vector<16x128xf32>
    %cst_16 = arith.constant 1.000000e+00 : f32
    %36 = vector.broadcast %cst_16 : f32 to vector<16x128xf32>
    %37 = arith.addf %36, %35 : vector<16x128xf32>
    %38 = arith.divf %36, %37 : vector<16x128xf32>
    %39 = arith.mulf %30, %13 : vector<16x128xf32>
    %40 = arith.mulf %24, %32 : vector<16x128xf32>
    %41 = arith.addf %39, %40 : vector<16x128xf32>
    %42 = math.tanh %41 : vector<16x128xf32>
    %43 = arith.mulf %38, %42 : vector<16x128xf32>
    %44 = vector.extract_strided_slice %10 {offsets = [1, 0, 0], sizes = [1, 16, 512], strides = [1, 1, 1]} : vector<8x16x512xf32> to vector<1x16x512xf32>
    %45 = vector.shape_cast %44 : vector<1x16x512xf32> to vector<16x512xf32>
    %46 = arith.truncf %43 : vector<16x128xf32> to vector<16x128xbf16>
    %cst_17 = arith.constant dense<0.000000e+00> : vector<16x512xf32>
    %47 = tpu.matmul %46, %11, %cst_17 {dimension_numbers = #tpu.dot_dimension_numbers<[1], [0], [0], [1], [0, 0, 1, 1], [], []>} : vector<16x128xbf16>, vector<128x512xbf16>, vector<16x512xf32> -> vector<16x512xf32>
    %48 = arith.addf %45, %47 : vector<16x512xf32>
    %49 = vector.extract_strided_slice %48 {offsets = [0, 0], sizes = [16, 128], strides = [1, 1]} : vector<16x512xf32> to vector<16x128xf32>
    %50 = arith.negf %49 : vector<16x128xf32>
    %51 = math.exp %50 : vector<16x128xf32>
    %cst_18 = arith.constant 1.000000e+00 : f32
    %52 = vector.broadcast %cst_18 : f32 to vector<16x128xf32>
    %53 = arith.addf %52, %51 : vector<16x128xf32>
    %54 = arith.divf %52, %53 : vector<16x128xf32>
    %55 = vector.extract_strided_slice %48 {offsets = [0, 128], sizes = [16, 128], strides = [1, 1]} : vector<16x512xf32> to vector<16x128xf32>
    %56 = arith.negf %55 : vector<16x128xf32>
    %57 = math.exp %56 : vector<16x128xf32>
    %cst_19 = arith.constant 1.000000e+00 : f32
    %58 = vector.broadcast %cst_19 : f32 to vector<16x128xf32>
    %59 = arith.addf %58, %57 : vector<16x128xf32>
    %60 = arith.divf %58, %59 : vector<16x128xf32>
    %61 = vector.extract_strided_slice %48 {offsets = [0, 256], sizes = [16, 128], strides = [1, 1]} : vector<16x512xf32> to vector<16x128xf32>
    %62 = math.tanh %61 : vector<16x128xf32>
    %63 = vector.extract_strided_slice %48 {offsets = [0, 384], sizes = [16, 128], strides = [1, 1]} : vector<16x512xf32> to vector<16x128xf32>
    %64 = arith.negf %63 : vector<16x128xf32>
    %65 = math.exp %64 : vector<16x128xf32>
    %cst_20 = arith.constant 1.000000e+00 : f32
    %66 = vector.broadcast %cst_20 : f32 to vector<16x128xf32>
    %67 = arith.addf %66, %65 : vector<16x128xf32>
    %68 = arith.divf %66, %67 : vector<16x128xf32>
    %69 = arith.mulf %60, %41 : vector<16x128xf32>
    %70 = arith.mulf %54, %62 : vector<16x128xf32>
    %71 = arith.addf %69, %70 : vector<16x128xf32>
    %72 = math.tanh %71 : vector<16x128xf32>
    %73 = arith.mulf %68, %72 : vector<16x128xf32>
    %74 = vector.extract_strided_slice %10 {offsets = [2, 0, 0], sizes = [1, 16, 512], strides = [1, 1, 1]} : vector<8x16x512xf32> to vector<1x16x512xf32>
    %75 = vector.shape_cast %74 : vector<1x16x512xf32> to vector<16x512xf32>
    %76 = arith.truncf %73 : vector<16x128xf32> to vector<16x128xbf16>
    %cst_21 = arith.constant dense<0.000000e+00> : vector<16x512xf32>
    %77 = tpu.matmul %76, %11, %cst_21 {dimension_numbers = #tpu.dot_dimension_numbers<[1], [0], [0], [1], [0, 0, 1, 1], [], []>} : vector<16x128xbf16>, vector<128x512xbf16>, vector<16x512xf32> -> vector<16x512xf32>
    %78 = arith.addf %75, %77 : vector<16x512xf32>
    %79 = vector.extract_strided_slice %78 {offsets = [0, 0], sizes = [16, 128], strides = [1, 1]} : vector<16x512xf32> to vector<16x128xf32>
    %80 = arith.negf %79 : vector<16x128xf32>
    %81 = math.exp %80 : vector<16x128xf32>
    %cst_22 = arith.constant 1.000000e+00 : f32
    %82 = vector.broadcast %cst_22 : f32 to vector<16x128xf32>
    %83 = arith.addf %82, %81 : vector<16x128xf32>
    %84 = arith.divf %82, %83 : vector<16x128xf32>
    %85 = vector.extract_strided_slice %78 {offsets = [0, 128], sizes = [16, 128], strides = [1, 1]} : vector<16x512xf32> to vector<16x128xf32>
    %86 = arith.negf %85 : vector<16x128xf32>
    %87 = math.exp %86 : vector<16x128xf32>
    %cst_23 = arith.constant 1.000000e+00 : f32
    %88 = vector.broadcast %cst_23 : f32 to vector<16x128xf32>
    %89 = arith.addf %88, %87 : vector<16x128xf32>
    %90 = arith.divf %88, %89 : vector<16x128xf32>
    %91 = vector.extract_strided_slice %78 {offsets = [0, 256], sizes = [16, 128], strides = [1, 1]} : vector<16x512xf32> to vector<16x128xf32>
    %92 = math.tanh %91 : vector<16x128xf32>
    %93 = vector.extract_strided_slice %78 {offsets = [0, 384], sizes = [16, 128], strides = [1, 1]} : vector<16x512xf32> to vector<16x128xf32>
    %94 = arith.negf %93 : vector<16x128xf32>
    %95 = math.exp %94 : vector<16x128xf32>
    %cst_24 = arith.constant 1.000000e+00 : f32
    %96 = vector.broadcast %cst_24 : f32 to vector<16x128xf32>
    %97 = arith.addf %96, %95 : vector<16x128xf32>
    %98 = arith.divf %96, %97 : vector<16x128xf32>
    %99 = arith.mulf %90, %71 : vector<16x128xf32>
    %100 = arith.mulf %84, %92 : vector<16x128xf32>
    %101 = arith.addf %99, %100 : vector<16x128xf32>
    %102 = math.tanh %101 : vector<16x128xf32>
    %103 = arith.mulf %98, %102 : vector<16x128xf32>
    %104 = vector.extract_strided_slice %10 {offsets = [3, 0, 0], sizes = [1, 16, 512], strides = [1, 1, 1]} : vector<8x16x512xf32> to vector<1x16x512xf32>
    %105 = vector.shape_cast %104 : vector<1x16x512xf32> to vector<16x512xf32>
    %106 = arith.truncf %103 : vector<16x128xf32> to vector<16x128xbf16>
    %cst_25 = arith.constant dense<0.000000e+00> : vector<16x512xf32>
    %107 = tpu.matmul %106, %11, %cst_25 {dimension_numbers = #tpu.dot_dimension_numbers<[1], [0], [0], [1], [0, 0, 1, 1], [], []>} : vector<16x128xbf16>, vector<128x512xbf16>, vector<16x512xf32> -> vector<16x512xf32>
    %108 = arith.addf %105, %107 : vector<16x512xf32>
    %109 = vector.extract_strided_slice %108 {offsets = [0, 0], sizes = [16, 128], strides = [1, 1]} : vector<16x512xf32> to vector<16x128xf32>
    %110 = arith.negf %109 : vector<16x128xf32>
    %111 = math.exp %110 : vector<16x128xf32>
    %cst_26 = arith.constant 1.000000e+00 : f32
    %112 = vector.broadcast %cst_26 : f32 to vector<16x128xf32>
    %113 = arith.addf %112, %111 : vector<16x128xf32>
    %114 = arith.divf %112, %113 : vector<16x128xf32>
    %115 = vector.extract_strided_slice %108 {offsets = [0, 128], sizes = [16, 128], strides = [1, 1]} : vector<16x512xf32> to vector<16x128xf32>
    %116 = arith.negf %115 : vector<16x128xf32>
    %117 = math.exp %116 : vector<16x128xf32>
    %cst_27 = arith.constant 1.000000e+00 : f32
    %118 = vector.broadcast %cst_27 : f32 to vector<16x128xf32>
    %119 = arith.addf %118, %117 : vector<16x128xf32>
    %120 = arith.divf %118, %119 : vector<16x128xf32>
    %121 = vector.extract_strided_slice %108 {offsets = [0, 256], sizes = [16, 128], strides = [1, 1]} : vector<16x512xf32> to vector<16x128xf32>
    %122 = math.tanh %121 : vector<16x128xf32>
    %123 = vector.extract_strided_slice %108 {offsets = [0, 384], sizes = [16, 128], strides = [1, 1]} : vector<16x512xf32> to vector<16x128xf32>
    %124 = arith.negf %123 : vector<16x128xf32>
    %125 = math.exp %124 : vector<16x128xf32>
    %cst_28 = arith.constant 1.000000e+00 : f32
    %126 = vector.broadcast %cst_28 : f32 to vector<16x128xf32>
    %127 = arith.addf %126, %125 : vector<16x128xf32>
    %128 = arith.divf %126, %127 : vector<16x128xf32>
    %129 = arith.mulf %120, %101 : vector<16x128xf32>
    %130 = arith.mulf %114, %122 : vector<16x128xf32>
    %131 = arith.addf %129, %130 : vector<16x128xf32>
    %132 = math.tanh %131 : vector<16x128xf32>
    %133 = arith.mulf %128, %132 : vector<16x128xf32>
    %134 = vector.extract_strided_slice %10 {offsets = [4, 0, 0], sizes = [1, 16, 512], strides = [1, 1, 1]} : vector<8x16x512xf32> to vector<1x16x512xf32>
    %135 = vector.shape_cast %134 : vector<1x16x512xf32> to vector<16x512xf32>
    %136 = arith.truncf %133 : vector<16x128xf32> to vector<16x128xbf16>
    %cst_29 = arith.constant dense<0.000000e+00> : vector<16x512xf32>
    %137 = tpu.matmul %136, %11, %cst_29 {dimension_numbers = #tpu.dot_dimension_numbers<[1], [0], [0], [1], [0, 0, 1, 1], [], []>} : vector<16x128xbf16>, vector<128x512xbf16>, vector<16x512xf32> -> vector<16x512xf32>
    %138 = arith.addf %135, %137 : vector<16x512xf32>
    %139 = vector.extract_strided_slice %138 {offsets = [0, 0], sizes = [16, 128], strides = [1, 1]} : vector<16x512xf32> to vector<16x128xf32>
    %140 = arith.negf %139 : vector<16x128xf32>
    %141 = math.exp %140 : vector<16x128xf32>
    %cst_30 = arith.constant 1.000000e+00 : f32
    %142 = vector.broadcast %cst_30 : f32 to vector<16x128xf32>
    %143 = arith.addf %142, %141 : vector<16x128xf32>
    %144 = arith.divf %142, %143 : vector<16x128xf32>
    %145 = vector.extract_strided_slice %138 {offsets = [0, 128], sizes = [16, 128], strides = [1, 1]} : vector<16x512xf32> to vector<16x128xf32>
    %146 = arith.negf %145 : vector<16x128xf32>
    %147 = math.exp %146 : vector<16x128xf32>
    %cst_31 = arith.constant 1.000000e+00 : f32
    %148 = vector.broadcast %cst_31 : f32 to vector<16x128xf32>
    %149 = arith.addf %148, %147 : vector<16x128xf32>
    %150 = arith.divf %148, %149 : vector<16x128xf32>
    %151 = vector.extract_strided_slice %138 {offsets = [0, 256], sizes = [16, 128], strides = [1, 1]} : vector<16x512xf32> to vector<16x128xf32>
    %152 = math.tanh %151 : vector<16x128xf32>
    %153 = vector.extract_strided_slice %138 {offsets = [0, 384], sizes = [16, 128], strides = [1, 1]} : vector<16x512xf32> to vector<16x128xf32>
    %154 = arith.negf %153 : vector<16x128xf32>
    %155 = math.exp %154 : vector<16x128xf32>
    %cst_32 = arith.constant 1.000000e+00 : f32
    %156 = vector.broadcast %cst_32 : f32 to vector<16x128xf32>
    %157 = arith.addf %156, %155 : vector<16x128xf32>
    %158 = arith.divf %156, %157 : vector<16x128xf32>
    %159 = arith.mulf %150, %131 : vector<16x128xf32>
    %160 = arith.mulf %144, %152 : vector<16x128xf32>
    %161 = arith.addf %159, %160 : vector<16x128xf32>
    %162 = math.tanh %161 : vector<16x128xf32>
    %163 = arith.mulf %158, %162 : vector<16x128xf32>
    %164 = vector.extract_strided_slice %10 {offsets = [5, 0, 0], sizes = [1, 16, 512], strides = [1, 1, 1]} : vector<8x16x512xf32> to vector<1x16x512xf32>
    %165 = vector.shape_cast %164 : vector<1x16x512xf32> to vector<16x512xf32>
    %166 = arith.truncf %163 : vector<16x128xf32> to vector<16x128xbf16>
    %cst_33 = arith.constant dense<0.000000e+00> : vector<16x512xf32>
    %167 = tpu.matmul %166, %11, %cst_33 {dimension_numbers = #tpu.dot_dimension_numbers<[1], [0], [0], [1], [0, 0, 1, 1], [], []>} : vector<16x128xbf16>, vector<128x512xbf16>, vector<16x512xf32> -> vector<16x512xf32>
    %168 = arith.addf %165, %167 : vector<16x512xf32>
    %169 = vector.extract_strided_slice %168 {offsets = [0, 0], sizes = [16, 128], strides = [1, 1]} : vector<16x512xf32> to vector<16x128xf32>
    %170 = arith.negf %169 : vector<16x128xf32>
    %171 = math.exp %170 : vector<16x128xf32>
    %cst_34 = arith.constant 1.000000e+00 : f32
    %172 = vector.broadcast %cst_34 : f32 to vector<16x128xf32>
    %173 = arith.addf %172, %171 : vector<16x128xf32>
    %174 = arith.divf %172, %173 : vector<16x128xf32>
    %175 = vector.extract_strided_slice %168 {offsets = [0, 128], sizes = [16, 128], strides = [1, 1]} : vector<16x512xf32> to vector<16x128xf32>
    %176 = arith.negf %175 : vector<16x128xf32>
    %177 = math.exp %176 : vector<16x128xf32>
    %cst_35 = arith.constant 1.000000e+00 : f32
    %178 = vector.broadcast %cst_35 : f32 to vector<16x128xf32>
    %179 = arith.addf %178, %177 : vector<16x128xf32>
    %180 = arith.divf %178, %179 : vector<16x128xf32>
    %181 = vector.extract_strided_slice %168 {offsets = [0, 256], sizes = [16, 128], strides = [1, 1]} : vector<16x512xf32> to vector<16x128xf32>
    %182 = math.tanh %181 : vector<16x128xf32>
    %183 = vector.extract_strided_slice %168 {offsets = [0, 384], sizes = [16, 128], strides = [1, 1]} : vector<16x512xf32> to vector<16x128xf32>
    %184 = arith.negf %183 : vector<16x128xf32>
    %185 = math.exp %184 : vector<16x128xf32>
    %cst_36 = arith.constant 1.000000e+00 : f32
    %186 = vector.broadcast %cst_36 : f32 to vector<16x128xf32>
    %187 = arith.addf %186, %185 : vector<16x128xf32>
    %188 = arith.divf %186, %187 : vector<16x128xf32>
    %189 = arith.mulf %180, %161 : vector<16x128xf32>
    %190 = arith.mulf %174, %182 : vector<16x128xf32>
    %191 = arith.addf %189, %190 : vector<16x128xf32>
    %192 = math.tanh %191 : vector<16x128xf32>
    %193 = arith.mulf %188, %192 : vector<16x128xf32>
    %194 = vector.extract_strided_slice %10 {offsets = [6, 0, 0], sizes = [1, 16, 512], strides = [1, 1, 1]} : vector<8x16x512xf32> to vector<1x16x512xf32>
    %195 = vector.shape_cast %194 : vector<1x16x512xf32> to vector<16x512xf32>
    %196 = arith.truncf %193 : vector<16x128xf32> to vector<16x128xbf16>
    %cst_37 = arith.constant dense<0.000000e+00> : vector<16x512xf32>
    %197 = tpu.matmul %196, %11, %cst_37 {dimension_numbers = #tpu.dot_dimension_numbers<[1], [0], [0], [1], [0, 0, 1, 1], [], []>} : vector<16x128xbf16>, vector<128x512xbf16>, vector<16x512xf32> -> vector<16x512xf32>
    %198 = arith.addf %195, %197 : vector<16x512xf32>
    %199 = vector.extract_strided_slice %198 {offsets = [0, 0], sizes = [16, 128], strides = [1, 1]} : vector<16x512xf32> to vector<16x128xf32>
    %200 = arith.negf %199 : vector<16x128xf32>
    %201 = math.exp %200 : vector<16x128xf32>
    %cst_38 = arith.constant 1.000000e+00 : f32
    %202 = vector.broadcast %cst_38 : f32 to vector<16x128xf32>
    %203 = arith.addf %202, %201 : vector<16x128xf32>
    %204 = arith.divf %202, %203 : vector<16x128xf32>
    %205 = vector.extract_strided_slice %198 {offsets = [0, 128], sizes = [16, 128], strides = [1, 1]} : vector<16x512xf32> to vector<16x128xf32>
    %206 = arith.negf %205 : vector<16x128xf32>
    %207 = math.exp %206 : vector<16x128xf32>
    %cst_39 = arith.constant 1.000000e+00 : f32
    %208 = vector.broadcast %cst_39 : f32 to vector<16x128xf32>
    %209 = arith.addf %208, %207 : vector<16x128xf32>
    %210 = arith.divf %208, %209 : vector<16x128xf32>
    %211 = vector.extract_strided_slice %198 {offsets = [0, 256], sizes = [16, 128], strides = [1, 1]} : vector<16x512xf32> to vector<16x128xf32>
    %212 = math.tanh %211 : vector<16x128xf32>
    %213 = vector.extract_strided_slice %198 {offsets = [0, 384], sizes = [16, 128], strides = [1, 1]} : vector<16x512xf32> to vector<16x128xf32>
    %214 = arith.negf %213 : vector<16x128xf32>
    %215 = math.exp %214 : vector<16x128xf32>
    %cst_40 = arith.constant 1.000000e+00 : f32
    %216 = vector.broadcast %cst_40 : f32 to vector<16x128xf32>
    %217 = arith.addf %216, %215 : vector<16x128xf32>
    %218 = arith.divf %216, %217 : vector<16x128xf32>
    %219 = arith.mulf %210, %191 : vector<16x128xf32>
    %220 = arith.mulf %204, %212 : vector<16x128xf32>
    %221 = arith.addf %219, %220 : vector<16x128xf32>
    %222 = math.tanh %221 : vector<16x128xf32>
    %223 = arith.mulf %218, %222 : vector<16x128xf32>
    %224 = vector.extract_strided_slice %10 {offsets = [7, 0, 0], sizes = [1, 16, 512], strides = [1, 1, 1]} : vector<8x16x512xf32> to vector<1x16x512xf32>
    %225 = vector.shape_cast %224 : vector<1x16x512xf32> to vector<16x512xf32>
    %226 = arith.truncf %223 : vector<16x128xf32> to vector<16x128xbf16>
    %cst_41 = arith.constant dense<0.000000e+00> : vector<16x512xf32>
    %227 = tpu.matmul %226, %11, %cst_41 {dimension_numbers = #tpu.dot_dimension_numbers<[1], [0], [0], [1], [0, 0, 1, 1], [], []>} : vector<16x128xbf16>, vector<128x512xbf16>, vector<16x512xf32> -> vector<16x512xf32>
    %228 = arith.addf %225, %227 : vector<16x512xf32>
    %229 = vector.extract_strided_slice %228 {offsets = [0, 0], sizes = [16, 128], strides = [1, 1]} : vector<16x512xf32> to vector<16x128xf32>
    %230 = arith.negf %229 : vector<16x128xf32>
    %231 = math.exp %230 : vector<16x128xf32>
    %cst_42 = arith.constant 1.000000e+00 : f32
    %232 = vector.broadcast %cst_42 : f32 to vector<16x128xf32>
    %233 = arith.addf %232, %231 : vector<16x128xf32>
    %234 = arith.divf %232, %233 : vector<16x128xf32>
    %235 = vector.extract_strided_slice %228 {offsets = [0, 128], sizes = [16, 128], strides = [1, 1]} : vector<16x512xf32> to vector<16x128xf32>
    %236 = arith.negf %235 : vector<16x128xf32>
    %237 = math.exp %236 : vector<16x128xf32>
    %cst_43 = arith.constant 1.000000e+00 : f32
    %238 = vector.broadcast %cst_43 : f32 to vector<16x128xf32>
    %239 = arith.addf %238, %237 : vector<16x128xf32>
    %240 = arith.divf %238, %239 : vector<16x128xf32>
    %241 = vector.extract_strided_slice %228 {offsets = [0, 256], sizes = [16, 128], strides = [1, 1]} : vector<16x512xf32> to vector<16x128xf32>
    %242 = math.tanh %241 : vector<16x128xf32>
    %243 = vector.extract_strided_slice %228 {offsets = [0, 384], sizes = [16, 128], strides = [1, 1]} : vector<16x512xf32> to vector<16x128xf32>
    %244 = arith.negf %243 : vector<16x128xf32>
    %245 = math.exp %244 : vector<16x128xf32>
    %cst_44 = arith.constant 1.000000e+00 : f32
    %246 = vector.broadcast %cst_44 : f32 to vector<16x128xf32>
    %247 = arith.addf %246, %245 : vector<16x128xf32>
    %248 = arith.divf %246, %247 : vector<16x128xf32>
    %249 = arith.mulf %240, %221 : vector<16x128xf32>
    %250 = arith.mulf %234, %242 : vector<16x128xf32>
    %251 = arith.addf %249, %250 : vector<16x128xf32>
    %252 = math.tanh %251 : vector<16x128xf32>
    %253 = arith.mulf %248, %252 : vector<16x128xf32>
    %c0_45 = arith.constant 0 : index
    %c0_46 = arith.constant 0 : index
    %254 = vector.load %arg9[%c0_45, %c0_46] : memref<16x128xf32, #tpu.memory_space<vmem>>, vector<16x128xf32>
    tpu.vector_store %arg9[%c0_45, %c0_46], %253 {strides = array<i32>} : memref<16x128xf32, #tpu.memory_space<vmem>>, vector<16x128xf32>,
    %c0_47 = arith.constant 0 : index
    %c0_48 = arith.constant 0 : index
    %255 = vector.load %arg10[%c0_47, %c0_48] : memref<16x128xf32, #tpu.memory_space<vmem>>, vector<16x128xf32>
    tpu.vector_store %arg10[%c0_47, %c0_48], %251 {strides = array<i32>} : memref<16x128xf32, #tpu.memory_space<vmem>>, vector<16x128xf32>,
    %c0_i32_49 = arith.constant 0 : i32
    %256 = arith.cmpi eq, %arg1, %c0_i32_49 : i32
    %257 = arith.extui %256 : i1 to i32
    %c0_i32_50 = arith.constant 0 : i32
    %258 = arith.cmpi ne, %257, %c0_i32_50 : i32
    scf.if %258 {
      %259 = arith.truncf %253 : vector<16x128xf32> to vector<16x128xbf16>
      %c0_51 = arith.constant 0 : index
      %c0_52 = arith.constant 0 : index
      %260 = vector.load %arg6[%c0_51, %c0_52] : memref<128x128xbf16, #tpu.memory_space<vmem>>, vector<128x128xbf16>
      %cst_53 = arith.constant dense<0.000000e+00> : vector<16x128xf32>
      %261 = tpu.matmul %259, %260, %cst_53 {dimension_numbers = #tpu.dot_dimension_numbers<[1], [0], [0], [1], [0, 0, 1, 1], [], []>} : vector<16x128xbf16>, vector<128x128xbf16>, vector<16x128xf32> -> vector<16x128xf32>
      %c0_54 = arith.constant 0 : index
      %c0_55 = arith.constant 0 : index
      %262 = vector.load %arg7[%c0_54, %c0_55] : memref<1x128xf32, #tpu.memory_space<vmem>>, vector<1x128xf32>
      %263 = vector.broadcast %262 : vector<1x128xf32> to vector<16x128xf32>
      %264 = arith.addf %261, %263 : vector<16x128xf32>
      %c0_56 = arith.constant 0 : index
      %c0_57 = arith.constant 0 : index
      %265 = vector.load %arg8[%c0_56, %c0_57] : memref<16x128xf32, #tpu.memory_space<vmem>>, vector<16x128xf32>
      tpu.vector_store %arg8[%c0_56, %c0_57], %264 {strides = array<i32>} : memref<16x128xf32, #tpu.memory_space<vmem>>, vector<16x128xf32>,
    } else {
    }
    return
  }
  func.func @transform_0(%arg0: i32, %arg1: i32) -> (i32, i32, i32) {
    %c0_i32 = arith.constant 0 : i32
    %c0_i32_0 = arith.constant 0 : i32
    return %arg1, %arg0, %c0_i32 : i32, i32, i32
  }
  func.func @transform_1(%arg0: i32, %arg1: i32) -> (i32, i32) {
    %c0_i32 = arith.constant 0 : i32
    %c0_i32_0 = arith.constant 0 : i32
    %c0_i32_1 = arith.constant 0 : i32
    return %c0_i32, %c0_i32_0 : i32, i32
  }
  func.func @transform_2(%arg0: i32, %arg1: i32) -> (i32, i32) {
    %c0_i32 = arith.constant 0 : i32
    %c0_i32_0 = arith.constant 0 : i32
    %c0_i32_1 = arith.constant 0 : i32
    return %c0_i32, %c0_i32_0 : i32, i32
  }
  func.func @transform_3(%arg0: i32, %arg1: i32) -> (i32, i32) {
    %c0_i32 = arith.constant 0 : i32
    %c0_i32_0 = arith.constant 0 : i32
    %c0_i32_1 = arith.constant 0 : i32
    return %c0_i32, %c0_i32_0 : i32, i32
  }
  func.func @transform_4(%arg0: i32, %arg1: i32) -> (i32, i32) {
    %c0_i32 = arith.constant 0 : i32
    %c0_i32_0 = arith.constant 0 : i32
    %c0_i32_1 = arith.constant 0 : i32
    return %c0_i32, %c0_i32_0 : i32, i32
  }
  func.func @transform_5(%arg0: i32, %arg1: i32) -> (i32, i32) {
    %c0_i32 = arith.constant 0 : i32
    %c0_i32_0 = arith.constant 0 : i32
    %c0_i32_1 = arith.constant 0 : i32
    return %c0_i32, %c0_i32_0 : i32, i32
  }
  func.func @transform_6(%arg0: i32, %arg1: i32) -> (i32, i32) {
    %c0_i32 = arith.constant 0 : i32
    %c0_i32_0 = arith.constant 0 : i32
    return %arg0, %c0_i32 : i32, i32
  }
}

</mosaic_0001>

<llo_original>
// kernel: simple_text_classifier.1
$region0: #{simple_text_classifier.1}
  #allocation0 [shape = 'u32[]', space=smem, size = 0x4, offset = 0x4, fixed_abs, tag = 'smem constant byte address 0x4 - core index']
  #allocation1 [shape = 'u32[144,128]{1,0:T(1,128)}', space=vmem, size = 0x12000, scoped, tag = 'internal scratch']
  #allocation2 [shape = 'f32[16,128]{1,0:T(8,128)}', space=vmem, size = 0x2000, scoped, tag = 'scratch operand']
  #allocation3 [shape = 'f32[16,128]{1,0:T(8,128)}', space=vmem, size = 0x2000, scoped, tag = 'scratch operand']
  %s0 = inlined_call_operand.vmem [shape: bf16[8,16,128], index: 0, kind: input, shape index: {}]
  %s1 = inlined_call_operand.vmem [shape: bf16[128,512], index: 1, kind: input, shape index: {}]
  %s2 = inlined_call_operand.vmem [shape: bf16[128,512], index: 2, kind: input, shape index: {}]
  %s3 = inlined_call_operand.vmem [shape: f32[1,512], index: 3, kind: input, shape index: {}]
  %s4 = inlined_call_operand.vmem [shape: bf16[128,128], index: 4, kind: input, shape index: {}]
  %s5 = inlined_call_operand.vmem [shape: f32[1,128], index: 5, kind: input, shape index: {}]
  %s6 = inlined_call_operand.vmem [shape: f32[16,128], index: 6, kind: output, shape index: {}]
  %s7 = sld [smem:[#allocation0]]
  $region42: #{simple_text_classifier.1} parent=0
    _
  %s9 = ssub.s32 1, %s7
  %s10 = scalar_select 0, %s9, %s7
  // Predicated region
  $region2: #{simple_text_classifier.1} parent=0 // pred_check
    _
  $region3: #{simple_text_classifier.1} parent=0 // pred_check_branch
    %12 = sbr.rel (0) target = $region5
  $region4: #{simple_text_classifier.1} parent=0 // pred_region
    _
  $region5: #{simple_text_classifier.1} parent=0 // pred_fallthru
    _
  // Predicated region
  $region6: #{simple_text_classifier.1} parent=0 // pred_check
    _
  $region7: #{simple_text_classifier.1} parent=0 // pred_check_branch
    %14 = sbr.rel (0) target = $region9
  $region8: #{simple_text_classifier.1} parent=0 // pred_region
    _
  $region9: #{simple_text_classifier.1} parent=0 // pred_fallthru
    _
  // Predicated region
  $region10: #{simple_text_classifier.1} parent=0 // pred_check
    _
  $region11: #{simple_text_classifier.1} parent=0 // pred_check_branch
    %16 = sbr.rel (0) target = $region13
  $region12: #{simple_text_classifier.1} parent=0 // pred_region
    _
  $region13: #{simple_text_classifier.1} parent=0 // pred_fallthru
    _
  // Predicated region
  $region14: #{simple_text_classifier.1} parent=0 // pred_check
    _
  $region15: #{simple_text_classifier.1} parent=0 // pred_check_branch
    %18 = sbr.rel (0) target = $region17
  $region16: #{simple_text_classifier.1} parent=0 // pred_region
    _
  $region17: #{simple_text_classifier.1} parent=0 // pred_fallthru
    _
  // Predicated region
  $region18: #{simple_text_classifier.1} parent=0 // pred_check
    _
  $region19: #{simple_text_classifier.1} parent=0 // pred_check_branch
    %20 = sbr.rel (0) target = $region21
  $region20: #{simple_text_classifier.1} parent=0 // pred_region
    _
  $region21: #{simple_text_classifier.1} parent=0 // pred_fallthru
    _
  // Predicated region
  $region22: #{simple_text_classifier.1} parent=0 // pred_check
    _
  $region23: #{simple_text_classifier.1} parent=0 // pred_check_branch
    %22 = sbr.rel (0) target = $region25
  $region24: #{simple_text_classifier.1} parent=0 // pred_region
    _
  $region25: #{simple_text_classifier.1} parent=0 // pred_fallthru
    _
  %p24 = scmp.eq.s32.totalorder 0, 0
  // Predicated region
  $region26: #{simple_text_classifier.1} parent=0 // pred_check
    %p25 = pneg %p24
  $region27: #{simple_text_classifier.1} parent=0 // pred_check_branch
    %27 = sbr.rel (%p25) target = $region29
  $region28: #{simple_text_classifier.1} parent=0 // pred_region
    %28 = vst [vmem:[#allocation2] sm:$0xff] 0.0
    %29 = vst [vmem:[#allocation2 + $0x8] sm:$0xff] 0.0
    %30 = vst [vmem:[#allocation3] sm:$0xff] 0.0
    %31 = vst [vmem:[#allocation3 + $0x8] sm:$0xff] 0.0
  $region29: #{simple_text_classifier.1} parent=0 // pred_fallthru
    _
  %v32 = vld [vmem:[%s0] sm:$0xf]
  %v33 = vld [vmem:[%s0 + $0x4] sm:$0xf]
  %v34 = vld [vmem:[%s0 + $0x8] sm:$0xf]
  %v35 = vld [vmem:[%s0 + $0xc] sm:$0xf]
  %v36 = vld [vmem:[%s0 + $0x10] sm:$0xf]
  %v37 = vld [vmem:[%s0 + $0x14] sm:$0xf]
  %v38 = vld [vmem:[%s0 + $0x18] sm:$0xf]
  %v39 = vld [vmem:[%s0 + $0x1c] sm:$0xf]
  %v40 = vld [vmem:[%s0 + $0x20] sm:$0xf]
  %v41 = vld [vmem:[%s0 + $0x24] sm:$0xf]
  %v42 = vld [vmem:[%s0 + $0x28] sm:$0xf]
  %v43 = vld [vmem:[%s0 + $0x2c] sm:$0xf]
  %v44 = vld [vmem:[%s0 + $0x30] sm:$0xf]
  %v45 = vld [vmem:[%s0 + $0x34] sm:$0xf]
  %v46 = vld [vmem:[%s0 + $0x38] sm:$0xf]
  %v47 = vld [vmem:[%s0 + $0x3c] sm:$0xf]
  %v48 = vld [vmem:[%s1] sm:$0xff]
  %v49 = vld [vmem:[%s1 + $0x8] sm:$0xff]
  %v50 = vld [vmem:[%s1 + $0x10] sm:$0xff]
  %v51 = vld [vmem:[%s1 + $0x18] sm:$0xff]
  %v52 = vld [vmem:[%s1 + $0x20] sm:$0xff]
  %v53 = vld [vmem:[%s1 + $0x28] sm:$0xff]
  %v54 = vld [vmem:[%s1 + $0x30] sm:$0xff]
  %v55 = vld [vmem:[%s1 + $0x38] sm:$0xff]
  %v56 = vld [vmem:[%s1 + $0x40] sm:$0xff]
  %v57 = vld [vmem:[%s1 + $0x48] sm:$0xff]
  %v58 = vld [vmem:[%s1 + $0x50] sm:$0xff]
  %v59 = vld [vmem:[%s1 + $0x58] sm:$0xff]
  %v60 = vld [vmem:[%s1 + $0x60] sm:$0xff]
  %v61 = vld [vmem:[%s1 + $0x68] sm:$0xff]
  %v62 = vld [vmem:[%s1 + $0x70] sm:$0xff]
  %v63 = vld [vmem:[%s1 + $0x78] sm:$0xff]
  %v64 = vld [vmem:[%s1 + $0x80] sm:$0xff]
  %v65 = vld [vmem:[%s1 + $0x88] sm:$0xff]
  %v66 = vld [vmem:[%s1 + $0x90] sm:$0xff]
  %v67 = vld [vmem:[%s1 + $0x98] sm:$0xff]
  %v68 = vld [vmem:[%s1 + $0xa0] sm:$0xff]
  %v69 = vld [vmem:[%s1 + $0xa8] sm:$0xff]
  %v70 = vld [vmem:[%s1 + $0xb0] sm:$0xff]
  %v71 = vld [vmem:[%s1 + $0xb8] sm:$0xff]
  %v72 = vld [vmem:[%s1 + $0xc0] sm:$0xff]
  %v73 = vld [vmem:[%s1 + $0xc8] sm:$0xff]
  %v74 = vld [vmem:[%s1 + $0xd0] sm:$0xff]
  %v75 = vld [vmem:[%s1 + $0xd8] sm:$0xff]
  %v76 = vld [vmem:[%s1 + $0xe0] sm:$0xff]
  %v77 = vld [vmem:[%s1 + $0xe8] sm:$0xff]
  %v78 = vld [vmem:[%s1 + $0xf0] sm:$0xff]
  %v79 = vld [vmem:[%s1 + $0xf8] sm:$0xff]
  %v80 = vld [vmem:[%s3] sm:$0xf]
  %v82 = vlaneseq
  %v83 = vshrl.u32 %v82, 7
  %v84 = vsub.s32 0, %v83
  %v85 = vrot.slane %v80, %v84
  %v86 = vlaneseq
  %v87 = vshrl.u32 %v86, 7
  %v88 = vsub.s32 1, %v87
  %v89 = vrot.slane %v80, %v88
  %v90 = vlaneseq
  %v91 = vshrl.u32 %v90, 7
  %v92 = vsub.s32 2, %v91
  %v93 = vrot.slane %v80, %v92
  %v94 = vlaneseq
  %v95 = vshrl.u32 %v94, 7
  %v96 = vsub.s32 3, %v95
  %v97 = vrot.slane %v80, %v96
  %v118 = vunpack.c.l.b16 %v32
  %v119 = vunpack.c.l.b16 %v33
  %v120 = vunpack.c.l.b16 %v34
  %v121 = vunpack.c.l.b16 %v35
  %v122 = vunpack.c.l.b16 %v36
  %v123 = vunpack.c.l.b16 %v37
  %v124 = vunpack.c.l.b16 %v38
  %v125 = vunpack.c.l.b16 %v39
  %v126 = vunpack.c.l.b16 %v40
  %v127 = vunpack.c.l.b16 %v41
  %v128 = vunpack.c.l.b16 %v42
  %v129 = vunpack.c.l.b16 %v43
  %v130 = vunpack.c.l.b16 %v44
  %v131 = vunpack.c.l.b16 %v45
  %v132 = vunpack.c.l.b16 %v46
  %v133 = vunpack.c.l.b16 %v47
  %v134 = vpack.c.b16 %v119, %v118
  %v135 = vpack.c.b16 %v121, %v120
  %v136 = vpack.c.b16 %v123, %v122
  %v137 = vpack.c.b16 %v125, %v124
  %v138 = vpack.c.b16 %v127, %v126
  %v139 = vpack.c.b16 %v129, %v128
  %v140 = vpack.c.b16 %v131, %v130
  %v141 = vpack.c.b16 %v133, %v132
  %v182 = vunpack.c.l.b16 %v48
  %v183 = vunpack.c.h.b16 %v48
  %v184 = vunpack.c.l.b16 %v49
  %v185 = vunpack.c.h.b16 %v49
  %v186 = vunpack.c.l.b16 %v50
  %v187 = vunpack.c.h.b16 %v50
  %v188 = vunpack.c.l.b16 %v51
  %v189 = vunpack.c.h.b16 %v51
  %v190 = vunpack.c.l.b16 %v52
  %v191 = vunpack.c.h.b16 %v52
  %v192 = vunpack.c.l.b16 %v53
  %v193 = vunpack.c.h.b16 %v53
  %v194 = vunpack.c.l.b16 %v54
  %v195 = vunpack.c.h.b16 %v54
  %v196 = vunpack.c.l.b16 %v55
  %v197 = vunpack.c.h.b16 %v55
  %v198 = vunpack.c.l.b16 %v56
  %v199 = vunpack.c.h.b16 %v56
  %v200 = vunpack.c.l.b16 %v57
  %v201 = vunpack.c.h.b16 %v57
  %v202 = vunpack.c.l.b16 %v58
  %v203 = vunpack.c.h.b16 %v58
  %v204 = vunpack.c.l.b16 %v59
  %v205 = vunpack.c.h.b16 %v59
  %v206 = vunpack.c.l.b16 %v60
  %v207 = vunpack.c.h.b16 %v60
  %v208 = vunpack.c.l.b16 %v61
  %v209 = vunpack.c.h.b16 %v61
  %v210 = vunpack.c.l.b16 %v62
  %v211 = vunpack.c.h.b16 %v62
  %v212 = vunpack.c.l.b16 %v63
  %v213 = vunpack.c.h.b16 %v63
  %v214 = vunpack.c.l.b16 %v64
  %v215 = vunpack.c.h.b16 %v64
  %v216 = vunpack.c.l.b16 %v65
  %v217 = vunpack.c.h.b16 %v65
  %v218 = vunpack.c.l.b16 %v66
  %v219 = vunpack.c.h.b16 %v66
  %v220 = vunpack.c.l.b16 %v67
  %v221 = vunpack.c.h.b16 %v67
  %v222 = vunpack.c.l.b16 %v68
  %v223 = vunpack.c.h.b16 %v68
  %v224 = vunpack.c.l.b16 %v69
  %v225 = vunpack.c.h.b16 %v69
  %v226 = vunpack.c.l.b16 %v70
  %v227 = vunpack.c.h.b16 %v70
  %v228 = vunpack.c.l.b16 %v71
  %v229 = vunpack.c.h.b16 %v71
  %v230 = vunpack.c.l.b16 %v72
  %v231 = vunpack.c.h.b16 %v72
  %v232 = vunpack.c.l.b16 %v73
  %v233 = vunpack.c.h.b16 %v73
  %v234 = vunpack.c.l.b16 %v74
  %v235 = vunpack.c.h.b16 %v74
  %v236 = vunpack.c.l.b16 %v75
  %v237 = vunpack.c.h.b16 %v75
  %v238 = vunpack.c.l.b16 %v76
  %v239 = vunpack.c.h.b16 %v76
  %v240 = vunpack.c.l.b16 %v77
  %v241 = vunpack.c.h.b16 %v77
  %v242 = vunpack.c.l.b16 %v78
  %v243 = vunpack.c.h.b16 %v78
  %v244 = vunpack.c.l.b16 %v79
  %v245 = vunpack.c.h.b16 %v79
  %v246 = vpack.c.b16 %v186, %v182
  %v247 = vpack.c.b16 %v187, %v183
  %v248 = vpack.c.b16 %v188, %v184
  %v249 = vpack.c.b16 %v189, %v185
  %v250 = vpack.c.b16 %v194, %v190
  %v251 = vpack.c.b16 %v195, %v191
  %v252 = vpack.c.b16 %v196, %v192
  %v253 = vpack.c.b16 %v197, %v193
  %v254 = vpack.c.b16 %v202, %v198
  %v255 = vpack.c.b16 %v203, %v199
  %v256 = vpack.c.b16 %v204, %v200
  %v257 = vpack.c.b16 %v205, %v201
  %v258 = vpack.c.b16 %v210, %v206
  %v259 = vpack.c.b16 %v211, %v207
  %v260 = vpack.c.b16 %v212, %v208
  %v261 = vpack.c.b16 %v213, %v209
  %v262 = vpack.c.b16 %v218, %v214
  %v263 = vpack.c.b16 %v219, %v215
  %v264 = vpack.c.b16 %v220, %v216
  %v265 = vpack.c.b16 %v221, %v217
  %v266 = vpack.c.b16 %v226, %v222
  %v267 = vpack.c.b16 %v227, %v223
  %v268 = vpack.c.b16 %v228, %v224
  %v269 = vpack.c.b16 %v229, %v225
  %v270 = vpack.c.b16 %v234, %v230
  %v271 = vpack.c.b16 %v235, %v231
  %v272 = vpack.c.b16 %v236, %v232
  %v273 = vpack.c.b16 %v237, %v233
  %v274 = vpack.c.b16 %v242, %v238
  %v275 = vpack.c.b16 %v243, %v239
  %v276 = vpack.c.b16 %v244, %v240
  %v277 = vpack.c.b16 %v245, %v241
  %310 = vmatprep.subr.bf16.mxu0 %v247
  %311 = vmatpush1.bf16.msra.mxu0 %v246
  %312 = vmatprep.subr.bf16.mxu0 %v251
  %313 = vmatpush1.bf16.msra.mxu0 %v250
  %314 = vmatprep.subr.bf16.mxu0 %v255
  %315 = vmatpush1.bf16.msra.mxu0 %v254
  %316 = vmatprep.subr.bf16.mxu0 %v259
  %317 = vmatpush1.bf16.msra.mxu0 %v258
  %318 = vmatprep.subr.bf16.mxu0 %v263
  %319 = vmatpush1.bf16.msra.mxu0 %v262
  %320 = vmatprep.subr.bf16.mxu0 %v267
  %321 = vmatpush1.bf16.msra.mxu0 %v266
  %322 = vmatprep.subr.bf16.mxu0 %v271
  %323 = vmatpush1.bf16.msra.mxu0 %v270
  %324 = vmatprep.subr.bf16.mxu0 %v275
  %325 = vmatpush1.bf16.msra.mxu0 %v274
  %326 = vmatprep.subr.bf16.mxu0 0
  %327 = vmatpush1.bf16.msra.mxu0 0
  %328 = vmatprep.subr.bf16.mxu0 0
  %329 = vmatpush1.bf16.msra.mxu0 0
  %330 = vmatprep.subr.bf16.mxu0 0
  %331 = vmatpush1.bf16.msra.mxu0 0
  %332 = vmatprep.subr.bf16.mxu0 0
  %333 = vmatpush1.bf16.msra.mxu0 0
  %334 = vmatprep.subr.bf16.mxu0 0
  %335 = vmatpush1.bf16.msra.mxu0 0
  %336 = vmatprep.subr.bf16.mxu0 0
  %337 = vmatpush1.bf16.msra.mxu0 0
  %338 = vmatprep.subr.bf16.mxu0 0
  %339 = vmatpush1.bf16.msra.mxu0 0
  %340 = vmatprep.subr.bf16.mxu0 0
  %341 = vmatpush1.bf16.msra.mxu0 0
  %342 = vmatprep.mubr.bf16.mxu0 0
  %343 = vmatmul.mubr.bf16.gmra.mrb[0].mxu0 %v134
  %v344 = vpop.f32.mrb[0].mxu0
  %v345 = vadd.f32 %v85, %v344
  %v346 = vpop.f32.mrb[0].mxu0
  %v347 = vadd.f32 %v89, %v346
  %v348 = vpop.f32.mrb[0].mxu0
  %v349 = vadd.f32 %v85, %v348
  %v350 = vpop.f32.mrb[0].mxu0
  %v351 = vadd.f32 %v89, %v350
  %352 = vmatprep.mubr.bf16.mxu0 0
  %353 = vmatmul.mubr.bf16.gmra.mrb[0].mxu0 %v135
  %v354 = vpop.f32.mrb[0].mxu0
  %v355 = vadd.f32 %v85, %v354
  %v356 = vpop.f32.mrb[0].mxu0
  %v357 = vadd.f32 %v89, %v356
  %v358 = vpop.f32.mrb[0].mxu0
  %v359 = vadd.f32 %v85, %v358
  %v360 = vpop.f32.mrb[0].mxu0
  %v361 = vadd.f32 %v89, %v360
  %362 = vmatprep.mubr.bf16.mxu0 0
  %363 = vmatmul.mubr.bf16.gmra.mrb[0].mxu0 %v136
  %v364 = vpop.f32.mrb[0].mxu0
  %v365 = vadd.f32 %v85, %v364
  %v366 = vpop.f32.mrb[0].mxu0
  %v367 = vadd.f32 %v89, %v366
  %v368 = vpop.f32.mrb[0].mxu0
  %v369 = vadd.f32 %v85, %v368
  %v370 = vpop.f32.mrb[0].mxu0
  %v371 = vadd.f32 %v89, %v370
  %372 = vmatprep.mubr.bf16.mxu0 0
  %373 = vmatmul.mubr.bf16.gmra.mrb[0].mxu0 %v137
  %v374 = vpop.f32.mrb[0].mxu0
  %v375 = vadd.f32 %v85, %v374
  %v376 = vpop.f32.mrb[0].mxu0
  %v377 = vadd.f32 %v89, %v376
  %v378 = vpop.f32.mrb[0].mxu0
  %v379 = vadd.f32 %v85, %v378
  %v380 = vpop.f32.mrb[0].mxu0
  %v381 = vadd.f32 %v89, %v380
  %382 = vmatprep.mubr.bf16.mxu0 0
  %383 = vmatmul.mubr.bf16.gmra.mrb[0].mxu0 %v138
  %v384 = vpop.f32.mrb[0].mxu0
  %v385 = vadd.f32 %v85, %v384
  %v386 = vpop.f32.mrb[0].mxu0
  %v387 = vadd.f32 %v89, %v386
  %v388 = vpop.f32.mrb[0].mxu0
  %v389 = vadd.f32 %v85, %v388
  %v390 = vpop.f32.mrb[0].mxu0
  %v391 = vadd.f32 %v89, %v390
  %392 = vmatprep.mubr.bf16.mxu0 0
  %393 = vmatmul.mubr.bf16.gmra.mrb[0].mxu0 %v139
  %v394 = vpop.f32.mrb[0].mxu0
  %v395 = vadd.f32 %v85, %v394
  %v396 = vpop.f32.mrb[0].mxu0
  %v397 = vadd.f32 %v89, %v396
  %v398 = vpop.f32.mrb[0].mxu0
  %v399 = vadd.f32 %v85, %v398
  %v400 = vpop.f32.mrb[0].mxu0
  %v401 = vadd.f32 %v89, %v400
  %402 = vmatprep.mubr.bf16.mxu0 0
  %403 = vmatmul.mubr.bf16.gmra.mrb[0].mxu0 %v140
  %v404 = vpop.f32.mrb[0].mxu0
  %v405 = vadd.f32 %v85, %v404
  %v406 = vpop.f32.mrb[0].mxu0
  %v407 = vadd.f32 %v89, %v406
  %v408 = vpop.f32.mrb[0].mxu0
  %v409 = vadd.f32 %v85, %v408
  %v410 = vpop.f32.mrb[0].mxu0
  %v411 = vadd.f32 %v89, %v410
  %412 = vmatprep.mubr.bf16.mxu0 0
  %413 = vmatmul.mubr.bf16.gmra.mrb[0].mxu0 %v141
  %v414 = vpop.f32.mrb[0].mxu0
  %v415 = vadd.f32 %v85, %v414
  %v416 = vpop.f32.mrb[0].mxu0
  %v417 = vadd.f32 %v89, %v416
  %v418 = vpop.f32.mrb[0].mxu0
  %v419 = vadd.f32 %v85, %v418
  %v420 = vpop.f32.mrb[0].mxu0
  %v421 = vadd.f32 %v89, %v420
  %422 = vdwg.mxu0
  %423 = vmatprep.subr.bf16.mxu0 %v249
  %424 = vmatpush1.bf16.msra.mxu0 %v248
  %425 = vmatprep.subr.bf16.mxu0 %v253
  %426 = vmatpush1.bf16.msra.mxu0 %v252
  %427 = vmatprep.subr.bf16.mxu0 %v257
  %428 = vmatpush1.bf16.msra.mxu0 %v256
  %429 = vmatprep.subr.bf16.mxu0 %v261
  %430 = vmatpush1.bf16.msra.mxu0 %v260
  %431 = vmatprep.subr.bf16.mxu0 %v265
  %432 = vmatpush1.bf16.msra.mxu0 %v264
  %433 = vmatprep.subr.bf16.mxu0 %v269
  %434 = vmatpush1.bf16.msra.mxu0 %v268
  %435 = vmatprep.subr.bf16.mxu0 %v273
  %436 = vmatpush1.bf16.msra.mxu0 %v272
  %437 = vmatprep.subr.bf16.mxu0 %v277
  %438 = vmatpush1.bf16.msra.mxu0 %v276
  %439 = vmatprep.subr.bf16.mxu0 0
  %440 = vmatpush1.bf16.msra.mxu0 0
  %441 = vmatprep.subr.bf16.mxu0 0
  %442 = vmatpush1.bf16.msra.mxu0 0
  %443 = vmatprep.subr.bf16.mxu0 0
  %444 = vmatpush1.bf16.msra.mxu0 0
  %445 = vmatprep.subr.bf16.mxu0 0
  %446 = vmatpush1.bf16.msra.mxu0 0
  %447 = vmatprep.subr.bf16.mxu0 0
  %448 = vmatpush1.bf16.msra.mxu0 0
  %449 = vmatprep.subr.bf16.mxu0 0
  %450 = vmatpush1.bf16.msra.mxu0 0
  %451 = vmatprep.subr.bf16.mxu0 0
  %452 = vmatpush1.bf16.msra.mxu0 0
  %453 = vmatprep.subr.bf16.mxu0 0
  %454 = vmatpush1.bf16.msra.mxu0 0
  %455 = vmatprep.mubr.bf16.mxu0 0
  %456 = vmatmul.mubr.bf16.gmra.mrb[0].mxu0 %v134
  %v457 = vpop.f32.mrb[0].mxu0
  %v458 = vadd.f32 %v93, %v457
  %v459 = vpop.f32.mrb[0].mxu0
  %v460 = vadd.f32 %v97, %v459
  %v461 = vpop.f32.mrb[0].mxu0
  %v462 = vadd.f32 %v93, %v461
  %v463 = vpop.f32.mrb[0].mxu0
  %v464 = vadd.f32 %v97, %v463
  %465 = vmatprep.mubr.bf16.mxu0 0
  %466 = vmatmul.mubr.bf16.gmra.mrb[0].mxu0 %v135
  %v467 = vpop.f32.mrb[0].mxu0
  %v468 = vadd.f32 %v93, %v467
  %v469 = vpop.f32.mrb[0].mxu0
  %v470 = vadd.f32 %v97, %v469
  %v471 = vpop.f32.mrb[0].mxu0
  %v472 = vadd.f32 %v93, %v471
  %v473 = vpop.f32.mrb[0].mxu0
  %v474 = vadd.f32 %v97, %v473
  %475 = vmatprep.mubr.bf16.mxu0 0
  %476 = vmatmul.mubr.bf16.gmra.mrb[0].mxu0 %v136
  %v477 = vpop.f32.mrb[0].mxu0
  %v478 = vadd.f32 %v93, %v477
  %v479 = vpop.f32.mrb[0].mxu0
  %v480 = vadd.f32 %v97, %v479
  %v481 = vpop.f32.mrb[0].mxu0
  %v482 = vadd.f32 %v93, %v481
  %v483 = vpop.f32.mrb[0].mxu0
  %v484 = vadd.f32 %v97, %v483
  %485 = vmatprep.mubr.bf16.mxu0 0
  %486 = vmatmul.mubr.bf16.gmra.mrb[0].mxu0 %v137
  %v487 = vpop.f32.mrb[0].mxu0
  %v488 = vadd.f32 %v93, %v487
  %v489 = vpop.f32.mrb[0].mxu0
  %v490 = vadd.f32 %v97, %v489
  %v491 = vpop.f32.mrb[0].mxu0
  %v492 = vadd.f32 %v93, %v491
  %v493 = vpop.f32.mrb[0].mxu0
  %v494 = vadd.f32 %v97, %v493
  %495 = vmatprep.mubr.bf16.mxu0 0
  %496 = vmatmul.mubr.bf16.gmra.mrb[0].mxu0 %v138
  %v497 = vpop.f32.mrb[0].mxu0
  %v498 = vadd.f32 %v93, %v497
  %v499 = vpop.f32.mrb[0].mxu0
  %v500 = vadd.f32 %v97, %v499
  %v501 = vpop.f32.mrb[0].mxu0
  %v502 = vadd.f32 %v93, %v501
  %v503 = vpop.f32.mrb[0].mxu0
  %v504 = vadd.f32 %v97, %v503
  %505 = vmatprep.mubr.bf16.mxu0 0
  %506 = vmatmul.mubr.bf16.gmra.mrb[0].mxu0 %v139
  %v507 = vpop.f32.mrb[0].mxu0
  %v508 = vadd.f32 %v93, %v507
  %v509 = vpop.f32.mrb[0].mxu0
  %v510 = vadd.f32 %v97, %v509
  %v511 = vpop.f32.mrb[0].mxu0
  %v512 = vadd.f32 %v93, %v511
  %v513 = vpop.f32.mrb[0].mxu0
  %v514 = vadd.f32 %v97, %v513
  %515 = vmatprep.mubr.bf16.mxu0 0
  %516 = vmatmul.mubr.bf16.gmra.mrb[0].mxu0 %v140
  %v517 = vpop.f32.mrb[0].mxu0
  %v518 = vadd.f32 %v93, %v517
  %v519 = vpop.f32.mrb[0].mxu0
  %v520 = vadd.f32 %v97, %v519
  %v521 = vpop.f32.mrb[0].mxu0
  %v522 = vadd.f32 %v93, %v521
  %v523 = vpop.f32.mrb[0].mxu0
  %v524 = vadd.f32 %v97, %v523
  %525 = vmatprep.mubr.bf16.mxu0 0
  %526 = vmatmul.mubr.bf16.gmra.mrb[0].mxu0 %v141
  %v527 = vpop.f32.mrb[0].mxu0
  %v528 = vadd.f32 %v93, %v527
  %v529 = vpop.f32.mrb[0].mxu0
  %v530 = vadd.f32 %v97, %v529
  %v531 = vpop.f32.mrb[0].mxu0
  %v532 = vadd.f32 %v93, %v531
  %v533 = vpop.f32.mrb[0].mxu0
  %v534 = vadd.f32 %v97, %v533
  %535 = vdwg.mxu0
  %v536 = vld [vmem:[%s2] sm:$0xff]
  %v537 = vld [vmem:[%s2 + $0x8] sm:$0xff]
  %v538 = vld [vmem:[%s2 + $0x10] sm:$0xff]
  %v539 = vld [vmem:[%s2 + $0x18] sm:$0xff]
  %v540 = vld [vmem:[%s2 + $0x20] sm:$0xff]
  %v541 = vld [vmem:[%s2 + $0x28] sm:$0xff]
  %v542 = vld [vmem:[%s2 + $0x30] sm:$0xff]
  %v543 = vld [vmem:[%s2 + $0x38] sm:$0xff]
  %v544 = vld [vmem:[%s2 + $0x40] sm:$0xff]
  %v545 = vld [vmem:[%s2 + $0x48] sm:$0xff]
  %v546 = vld [vmem:[%s2 + $0x50] sm:$0xff]
  %v547 = vld [vmem:[%s2 + $0x58] sm:$0xff]
  %v548 = vld [vmem:[%s2 + $0x60] sm:$0xff]
  %v549 = vld [vmem:[%s2 + $0x68] sm:$0xff]
  %v550 = vld [vmem:[%s2 + $0x70] sm:$0xff]
  %v551 = vld [vmem:[%s2 + $0x78] sm:$0xff]
  %v552 = vld [vmem:[%s2 + $0x80] sm:$0xff]
  %v553 = vld [vmem:[%s2 + $0x88] sm:$0xff]
  %v554 = vld [vmem:[%s2 + $0x90] sm:$0xff]
  %v555 = vld [vmem:[%s2 + $0x98] sm:$0xff]
  %v556 = vld [vmem:[%s2 + $0xa0] sm:$0xff]
  %v557 = vld [vmem:[%s2 + $0xa8] sm:$0xff]
  %v558 = vld [vmem:[%s2 + $0xb0] sm:$0xff]
  %v559 = vld [vmem:[%s2 + $0xb8] sm:$0xff]
  %v560 = vld [vmem:[%s2 + $0xc0] sm:$0xff]
  %v561 = vld [vmem:[%s2 + $0xc8] sm:$0xff]
  %v562 = vld [vmem:[%s2 + $0xd0] sm:$0xff]
  %v563 = vld [vmem:[%s2 + $0xd8] sm:$0xff]
  %v564 = vld [vmem:[%s2 + $0xe0] sm:$0xff]
  %v565 = vld [vmem:[%s2 + $0xe8] sm:$0xff]
  %v566 = vld [vmem:[%s2 + $0xf0] sm:$0xff]
  %v567 = vld [vmem:[%s2 + $0xf8] sm:$0xff]
  %v568 = vld [vmem:[#allocation2] sm:$0xff]
  %v569 = vld [vmem:[#allocation2 + $0x8] sm:$0xff]
  %v570 = vld [vmem:[#allocation3] sm:$0xff]
  %v571 = vld [vmem:[#allocation3 + $0x8] sm:$0xff]
  %v572 = vpack.c.bf16 %v569, %v568
  %v605 = vunpack.c.l.b16 %v536
  %v606 = vunpack.c.h.b16 %v536
  %v607 = vunpack.c.l.b16 %v537
  %v608 = vunpack.c.h.b16 %v537
  %v609 = vunpack.c.l.b16 %v538
  %v610 = vunpack.c.h.b16 %v538
  %v611 = vunpack.c.l.b16 %v539
  %v612 = vunpack.c.h.b16 %v539
  %v613 = vunpack.c.l.b16 %v540
  %v614 = vunpack.c.h.b16 %v540
  %v615 = vunpack.c.l.b16 %v541
  %v616 = vunpack.c.h.b16 %v541
  %v617 = vunpack.c.l.b16 %v542
  %v618 = vunpack.c.h.b16 %v542
  %v619 = vunpack.c.l.b16 %v543
  %v620 = vunpack.c.h.b16 %v543
  %v621 = vunpack.c.l.b16 %v544
  %v622 = vunpack.c.h.b16 %v544
  %v623 = vunpack.c.l.b16 %v545
  %v624 = vunpack.c.h.b16 %v545
  %v625 = vunpack.c.l.b16 %v546
  %v626 = vunpack.c.h.b16 %v546
  %v627 = vunpack.c.l.b16 %v547
  %v628 = vunpack.c.h.b16 %v547
  %v629 = vunpack.c.l.b16 %v548
  %v630 = vunpack.c.h.b16 %v548
  %v631 = vunpack.c.l.b16 %v549
  %v632 = vunpack.c.h.b16 %v549
  %v633 = vunpack.c.l.b16 %v550
  %v634 = vunpack.c.h.b16 %v550
  %v635 = vunpack.c.l.b16 %v551
  %v636 = vunpack.c.h.b16 %v551
  %v637 = vunpack.c.l.b16 %v552
  %v638 = vunpack.c.h.b16 %v552
  %v639 = vunpack.c.l.b16 %v553
  %v640 = vunpack.c.h.b16 %v553
  %v641 = vunpack.c.l.b16 %v554
  %v642 = vunpack.c.h.b16 %v554
  %v643 = vunpack.c.l.b16 %v555
  %v644 = vunpack.c.h.b16 %v555
  %v645 = vunpack.c.l.b16 %v556
  %v646 = vunpack.c.h.b16 %v556
  %v647 = vunpack.c.l.b16 %v557
  %v648 = vunpack.c.h.b16 %v557
  %v649 = vunpack.c.l.b16 %v558
  %v650 = vunpack.c.h.b16 %v558
  %v651 = vunpack.c.l.b16 %v559
  %v652 = vunpack.c.h.b16 %v559
  %v653 = vunpack.c.l.b16 %v560
  %v654 = vunpack.c.h.b16 %v560
  %v655 = vunpack.c.l.b16 %v561
  %v656 = vunpack.c.h.b16 %v561
  %v657 = vunpack.c.l.b16 %v562
  %v658 = vunpack.c.h.b16 %v562
  %v659 = vunpack.c.l.b16 %v563
  %v660 = vunpack.c.h.b16 %v563
  %v661 = vunpack.c.l.b16 %v564
  %v662 = vunpack.c.h.b16 %v564
  %v663 = vunpack.c.l.b16 %v565
  %v664 = vunpack.c.h.b16 %v565
  %v665 = vunpack.c.l.b16 %v566
  %v666 = vunpack.c.h.b16 %v566
  %v667 = vunpack.c.l.b16 %v567
  %v668 = vunpack.c.h.b16 %v567
  %v669 = vpack.c.b16 %v609, %v605
  %v670 = vpack.c.b16 %v610, %v606
  %v671 = vpack.c.b16 %v611, %v607
  %v672 = vpack.c.b16 %v612, %v608
  %v673 = vpack.c.b16 %v617, %v613
  %v674 = vpack.c.b16 %v618, %v614
  %v675 = vpack.c.b16 %v619, %v615
  %v676 = vpack.c.b16 %v620, %v616
  %v677 = vpack.c.b16 %v625, %v621
  %v678 = vpack.c.b16 %v626, %v622
  %v679 = vpack.c.b16 %v627, %v623
  %v680 = vpack.c.b16 %v628, %v624
  %v681 = vpack.c.b16 %v633, %v629
  %v682 = vpack.c.b16 %v634, %v630
  %v683 = vpack.c.b16 %v635, %v631
  %v684 = vpack.c.b16 %v636, %v632
  %v685 = vpack.c.b16 %v641, %v637
  %v686 = vpack.c.b16 %v642, %v638
  %v687 = vpack.c.b16 %v643, %v639
  %v688 = vpack.c.b16 %v644, %v640
  %v689 = vpack.c.b16 %v649, %v645
  %v690 = vpack.c.b16 %v650, %v646
  %v691 = vpack.c.b16 %v651, %v647
  %v692 = vpack.c.b16 %v652, %v648
  %v693 = vpack.c.b16 %v657, %v653
  %v694 = vpack.c.b16 %v658, %v654
  %v695 = vpack.c.b16 %v659, %v655
  %v696 = vpack.c.b16 %v660, %v656
  %v697 = vpack.c.b16 %v665, %v661
  %v698 = vpack.c.b16 %v666, %v662
  %v699 = vpack.c.b16 %v667, %v663
  %v700 = vpack.c.b16 %v668, %v664
  %733 = vmatprep.subr.bf16.mxu0 %v670
  %734 = vmatpush1.bf16.msra.mxu0 %v669
  %735 = vmatprep.subr.bf16.mxu0 %v674
  %736 = vmatpush1.bf16.msra.mxu0 %v673
  %737 = vmatprep.subr.bf16.mxu0 %v678
  %738 = vmatpush1.bf16.msra.mxu0 %v677
  %739 = vmatprep.subr.bf16.mxu0 %v682
  %740 = vmatpush1.bf16.msra.mxu0 %v681
  %741 = vmatprep.subr.bf16.mxu0 %v686
  %742 = vmatpush1.bf16.msra.mxu0 %v685
  %743 = vmatprep.subr.bf16.mxu0 %v690
  %744 = vmatpush1.bf16.msra.mxu0 %v689
  %745 = vmatprep.subr.bf16.mxu0 %v694
  %746 = vmatpush1.bf16.msra.mxu0 %v693
  %747 = vmatprep.subr.bf16.mxu0 %v698
  %748 = vmatpush1.bf16.msra.mxu0 %v697
  %749 = vmatprep.subr.bf16.mxu0 0
  %750 = vmatpush1.bf16.msra.mxu0 0
  %751 = vmatprep.subr.bf16.mxu0 0
  %752 = vmatpush1.bf16.msra.mxu0 0
  %753 = vmatprep.subr.bf16.mxu0 0
  %754 = vmatpush1.bf16.msra.mxu0 0
  %755 = vmatprep.subr.bf16.mxu0 0
  %756 = vmatpush1.bf16.msra.mxu0 0
  %757 = vmatprep.subr.bf16.mxu0 0
  %758 = vmatpush1.bf16.msra.mxu0 0
  %759 = vmatprep.subr.bf16.mxu0 0
  %760 = vmatpush1.bf16.msra.mxu0 0
  %761 = vmatprep.subr.bf16.mxu0 0
  %762 = vmatpush1.bf16.msra.mxu0 0
  %763 = vmatprep.subr.bf16.mxu0 0
  %764 = vmatpush1.bf16.msra.mxu0 0
  %765 = vmatprep.mubr.bf16.mxu0 0
  %766 = vmatmul.mubr.bf16.gmra.mrb[0].mxu0 %v572
  %v767 = vpop.f32.mrb[0].mxu0
  %v768 = vadd.f32 0.0, %v767
  %v769 = vpop.f32.mrb[0].mxu0
  %v770 = vadd.f32 0.0, %v769
  %v771 = vpop.f32.mrb[0].mxu0
  %v772 = vadd.f32 0.0, %v771
  %v773 = vpop.f32.mrb[0].mxu0
  %v774 = vadd.f32 0.0, %v773
  %775 = vdwg.mxu0
  %776 = vmatprep.subr.bf16.mxu0 %v672
  %777 = vmatpush1.bf16.msra.mxu0 %v671
  %778 = vmatprep.subr.bf16.mxu0 %v676
  %779 = vmatpush1.bf16.msra.mxu0 %v675
  %780 = vmatprep.subr.bf16.mxu0 %v680
  %781 = vmatpush1.bf16.msra.mxu0 %v679
  %782 = vmatprep.subr.bf16.mxu0 %v684
  %783 = vmatpush1.bf16.msra.mxu0 %v683
  %784 = vmatprep.subr.bf16.mxu0 %v688
  %785 = vmatpush1.bf16.msra.mxu0 %v687
  %786 = vmatprep.subr.bf16.mxu0 %v692
  %787 = vmatpush1.bf16.msra.mxu0 %v691
  %788 = vmatprep.subr.bf16.mxu0 %v696
  %789 = vmatpush1.bf16.msra.mxu0 %v695
  %790 = vmatprep.subr.bf16.mxu0 %v700
  %791 = vmatpush1.bf16.msra.mxu0 %v699
  %792 = vmatprep.subr.bf16.mxu0 0
  %793 = vmatpush1.bf16.msra.mxu0 0
  %794 = vmatprep.subr.bf16.mxu0 0
  %795 = vmatpush1.bf16.msra.mxu0 0
  %796 = vmatprep.subr.bf16.mxu0 0
  %797 = vmatpush1.bf16.msra.mxu0 0
  %798 = vmatprep.subr.bf16.mxu0 0
  %799 = vmatpush1.bf16.msra.mxu0 0
  %800 = vmatprep.subr.bf16.mxu0 0
  %801 = vmatpush1.bf16.msra.mxu0 0
  %802 = vmatprep.subr.bf16.mxu0 0
  %803 = vmatpush1.bf16.msra.mxu0 0
  %804 = vmatprep.subr.bf16.mxu0 0
  %805 = vmatpush1.bf16.msra.mxu0 0
  %806 = vmatprep.subr.bf16.mxu0 0
  %807 = vmatpush1.bf16.msra.mxu0 0
  %808 = vmatprep.mubr.bf16.mxu0 0
  %809 = vmatmul.mubr.bf16.gmra.mrb[0].mxu0 %v572
  %v810 = vpop.f32.mrb[0].mxu0
  %v811 = vadd.f32 0.0, %v810
  %v812 = vpop.f32.mrb[0].mxu0
  %v813 = vadd.f32 0.0, %v812
  %v814 = vpop.f32.mrb[0].mxu0
  %v815 = vadd.f32 0.0, %v814
  %v816 = vpop.f32.mrb[0].mxu0
  %v817 = vadd.f32 0.0, %v816
  %818 = vdwg.mxu0
  %v819 = vadd.f32 %v345, %v768
  %v820 = vadd.f32 %v347, %v770
  %v821 = vadd.f32 %v458, %v811
  %v822 = vadd.f32 %v460, %v813
  %v823 = vadd.f32 %v349, %v772
  %v824 = vadd.f32 %v351, %v774
  %v825 = vadd.f32 %v462, %v815
  %v826 = vadd.f32 %v464, %v817
  %v827 = vxor.u32 %v819, 2147483648
  %v828 = vxor.u32 %v823, 2147483648
  %v829 = vmul.f32 %v827, 1.442695
  %v830 = vpow.pop %v829
  %v831 = vmul.f32 %v828, 1.442695
  %v832 = vpow.pop %v831
  %v833 = vadd.f32 %v830, 1.0
  %v834 = vadd.f32 %v832, 1.0
  %v835 = vrcp.pop %v833
  %v836 = vmul.f32 1.0, %v835
  %v837 = vrcp.pop %v834
  %v838 = vmul.f32 1.0, %v837
  %v839 = vxor.u32 %v820, 2147483648
  %v840 = vxor.u32 %v824, 2147483648
  %v841 = vmul.f32 %v839, 1.442695
  %v842 = vpow.pop %v841
  %v843 = vmul.f32 %v840, 1.442695
  %v844 = vpow.pop %v843
  %v845 = vadd.f32 %v842, 1.0
  %v846 = vadd.f32 %v844, 1.0
  %v847 = vrcp.pop %v845
  %v848 = vmul.f32 1.0, %v847
  %v849 = vrcp.pop %v846
  %v850 = vmul.f32 1.0, %v849
  %v851 = vtanh.pop %v821
  %v852 = vtanh.pop %v825
  %v853 = vxor.u32 %v822, 2147483648
  %v854 = vxor.u32 %v826, 2147483648
  %v855 = vmul.f32 %v853, 1.442695
  %v856 = vpow.pop %v855
  %v857 = vmul.f32 %v854, 1.442695
  %v858 = vpow.pop %v857
  %v859 = vadd.f32 %v856, 1.0
  %v860 = vadd.f32 %v858, 1.0
  %v861 = vrcp.pop %v859
  %v862 = vmul.f32 1.0, %v861
  %v863 = vrcp.pop %v860
  %v864 = vmul.f32 1.0, %v863
  %v865 = vmul.f32 %v848, %v570
  %v866 = vmul.f32 %v850, %v571
  %v867 = vmul.f32 %v836, %v851
  %v868 = vmul.f32 %v838, %v852
  %v869 = vadd.f32 %v865, %v867
  %v870 = vadd.f32 %v866, %v868
  %v871 = vtanh.pop %v869
  %v872 = vtanh.pop %v870
  %v873 = vmul.f32 %v862, %v871
  %v874 = vmul.f32 %v864, %v872
  %v875 = vpack.c.bf16 %v874, %v873
  %876 = vmatprep.subr.bf16.mxu0 %v670
  %877 = vmatpush1.bf16.msra.mxu0 %v669
  %878 = vmatprep.subr.bf16.mxu0 %v674
  %879 = vmatpush1.bf16.msra.mxu0 %v673
  %880 = vmatprep.subr.bf16.mxu0 %v678
  %881 = vmatpush1.bf16.msra.mxu0 %v677
  %882 = vmatprep.subr.bf16.mxu0 %v682
  %883 = vmatpush1.bf16.msra.mxu0 %v681
  %884 = vmatprep.subr.bf16.mxu0 %v686
  %885 = vmatpush1.bf16.msra.mxu0 %v685
  %886 = vmatprep.subr.bf16.mxu0 %v690
  %887 = vmatpush1.bf16.msra.mxu0 %v689
  %888 = vmatprep.subr.bf16.mxu0 %v694
  %889 = vmatpush1.bf16.msra.mxu0 %v693
  %890 = vmatprep.subr.bf16.mxu0 %v698
  %891 = vmatpush1.bf16.msra.mxu0 %v697
  %892 = vmatprep.subr.bf16.mxu0 0
  %893 = vmatpush1.bf16.msra.mxu0 0
  %894 = vmatprep.subr.bf16.mxu0 0
  %895 = vmatpush1.bf16.msra.mxu0 0
  %896 = vmatprep.subr.bf16.mxu0 0
  %897 = vmatpush1.bf16.msra.mxu0 0
  %898 = vmatprep.subr.bf16.mxu0 0
  %899 = vmatpush1.bf16.msra.mxu0 0
  %900 = vmatprep.subr.bf16.mxu0 0
  %901 = vmatpush1.bf16.msra.mxu0 0
  %902 = vmatprep.subr.bf16.mxu0 0
  %903 = vmatpush1.bf16.msra.mxu0 0
  %904 = vmatprep.subr.bf16.mxu0 0
  %905 = vmatpush1.bf16.msra.mxu0 0
  %906 = vmatprep.subr.bf16.mxu0 0
  %907 = vmatpush1.bf16.msra.mxu0 0
  %908 = vmatprep.mubr.bf16.mxu0 0
  %909 = vmatmul.mubr.bf16.gmra.mrb[0].mxu0 %v875
  %v910 = vpop.f32.mrb[0].mxu0
  %v911 = vadd.f32 0.0, %v910
  %v912 = vpop.f32.mrb[0].mxu0
  %v913 = vadd.f32 0.0, %v912
  %v914 = vpop.f32.mrb[0].mxu0
  %v915 = vadd.f32 0.0, %v914
  %v916 = vpop.f32.mrb[0].mxu0
  %v917 = vadd.f32 0.0, %v916
  %918 = vdwg.mxu0
  %919 = vmatprep.subr.bf16.mxu0 %v672
  %920 = vmatpush1.bf16.msra.mxu0 %v671
  %921 = vmatprep.subr.bf16.mxu0 %v676
  %922 = vmatpush1.bf16.msra.mxu0 %v675
  %923 = vmatprep.subr.bf16.mxu0 %v680
  %924 = vmatpush1.bf16.msra.mxu0 %v679
  %925 = vmatprep.subr.bf16.mxu0 %v684
  %926 = vmatpush1.bf16.msra.mxu0 %v683
  %927 = vmatprep.subr.bf16.mxu0 %v688
  %928 = vmatpush1.bf16.msra.mxu0 %v687
  %929 = vmatprep.subr.bf16.mxu0 %v692
  %930 = vmatpush1.bf16.msra.mxu0 %v691
  %931 = vmatprep.subr.bf16.mxu0 %v696
  %932 = vmatpush1.bf16.msra.mxu0 %v695
  %933 = vmatprep.subr.bf16.mxu0 %v700
  %934 = vmatpush1.bf16.msra.mxu0 %v699
  %935 = vmatprep.subr.bf16.mxu0 0
  %936 = vmatpush1.bf16.msra.mxu0 0
  %937 = vmatprep.subr.bf16.mxu0 0
  %938 = vmatpush1.bf16.msra.mxu0 0
  %939 = vmatprep.subr.bf16.mxu0 0
  %940 = vmatpush1.bf16.msra.mxu0 0
  %941 = vmatprep.subr.bf16.mxu0 0
  %942 = vmatpush1.bf16.msra.mxu0 0
  %943 = vmatprep.subr.bf16.mxu0 0
  %944 = vmatpush1.bf16.msra.mxu0 0
  %945 = vmatprep.subr.bf16.mxu0 0
  %946 = vmatpush1.bf16.msra.mxu0 0
  %947 = vmatprep.subr.bf16.mxu0 0
  %948 = vmatpush1.bf16.msra.mxu0 0
  %949 = vmatprep.subr.bf16.mxu0 0
  %950 = vmatpush1.bf16.msra.mxu0 0
  %951 = vmatprep.mubr.bf16.mxu0 0
  %952 = vmatmul.mubr.bf16.gmra.mrb[0].mxu0 %v875
  %v953 = vpop.f32.mrb[0].mxu0
  %v954 = vadd.f32 0.0, %v953
  %v955 = vpop.f32.mrb[0].mxu0
  %v956 = vadd.f32 0.0, %v955
  %v957 = vpop.f32.mrb[0].mxu0
  %v958 = vadd.f32 0.0, %v957
  %v959 = vpop.f32.mrb[0].mxu0
  %v960 = vadd.f32 0.0, %v959
  %961 = vdwg.mxu0
  %v962 = vadd.f32 %v355, %v911
  %v963 = vadd.f32 %v357, %v913
  %v964 = vadd.f32 %v468, %v954
  %v965 = vadd.f32 %v470, %v956
  %v966 = vadd.f32 %v359, %v915
  %v967 = vadd.f32 %v361, %v917
  %v968 = vadd.f32 %v472, %v958
  %v969 = vadd.f32 %v474, %v960
  %v970 = vxor.u32 %v962, 2147483648
  %v971 = vxor.u32 %v966, 2147483648
  %v972 = vmul.f32 %v970, 1.442695
  %v973 = vpow.pop %v972
  %v974 = vmul.f32 %v971, 1.442695
  %v975 = vpow.pop %v974
  %v976 = vadd.f32 %v973, 1.0
  %v977 = vadd.f32 %v975, 1.0
  %v978 = vrcp.pop %v976
  %v979 = vmul.f32 1.0, %v978
  %v980 = vrcp.pop %v977
  %v981 = vmul.f32 1.0, %v980
  %v982 = vxor.u32 %v963, 2147483648
  %v983 = vxor.u32 %v967, 2147483648
  %v984 = vmul.f32 %v982, 1.442695
  %v985 = vpow.pop %v984
  %v986 = vmul.f32 %v983, 1.442695
  %v987 = vpow.pop %v986
  %v988 = vadd.f32 %v985, 1.0
  %v989 = vadd.f32 %v987, 1.0
  %v990 = vrcp.pop %v988
  %v991 = vmul.f32 1.0, %v990
  %v992 = vrcp.pop %v989
  %v993 = vmul.f32 1.0, %v992
  %v994 = vtanh.pop %v964
  %v995 = vtanh.pop %v968
  %v996 = vxor.u32 %v965, 2147483648
  %v997 = vxor.u32 %v969, 2147483648
  %v998 = vmul.f32 %v996, 1.442695
  %v999 = vpow.pop %v998
  %v1000 = vmul.f32 %v997, 1.442695
  %v1001 = vpow.pop %v1000
  %v1002 = vadd.f32 %v999, 1.0
  %v1003 = vadd.f32 %v1001, 1.0
  %v1004 = vrcp.pop %v1002
  %v1005 = vmul.f32 1.0, %v1004
  %v1006 = vrcp.pop %v1003
  %v1007 = vmul.f32 1.0, %v1006
  %v1008 = vmul.f32 %v991, %v869
  %v1009 = vmul.f32 %v993, %v870
  %v1010 = vmul.f32 %v979, %v994
  %v1011 = vmul.f32 %v981, %v995
  %v1012 = vadd.f32 %v1008, %v1010
  %v1013 = vadd.f32 %v1009, %v1011
  %v1014 = vtanh.pop %v1012
  %v1015 = vtanh.pop %v1013
  %v1016 = vmul.f32 %v1005, %v1014
  %v1017 = vmul.f32 %v1007, %v1015
  %v1018 = vpack.c.bf16 %v1017, %v1016
  %1019 = vmatprep.subr.bf16.mxu0 %v670
  %1020 = vmatpush1.bf16.msra.mxu0 %v669
  %1021 = vmatprep.subr.bf16.mxu0 %v674
  %1022 = vmatpush1.bf16.msra.mxu0 %v673
  %1023 = vmatprep.subr.bf16.mxu0 %v678
  %1024 = vmatpush1.bf16.msra.mxu0 %v677
  %1025 = vmatprep.subr.bf16.mxu0 %v682
  %1026 = vmatpush1.bf16.msra.mxu0 %v681
  %1027 = vmatprep.subr.bf16.mxu0 %v686
  %1028 = vmatpush1.bf16.msra.mxu0 %v685
  %1029 = vmatprep.subr.bf16.mxu0 %v690
  %1030 = vmatpush1.bf16.msra.mxu0 %v689
  %1031 = vmatprep.subr.bf16.mxu0 %v694
  %1032 = vmatpush1.bf16.msra.mxu0 %v693
  %1033 = vmatprep.subr.bf16.mxu0 %v698
  %1034 = vmatpush1.bf16.msra.mxu0 %v697
  %1035 = vmatprep.subr.bf16.mxu0 0
  %1036 = vmatpush1.bf16.msra.mxu0 0
  %1037 = vmatprep.subr.bf16.mxu0 0
  %1038 = vmatpush1.bf16.msra.mxu0 0
  %1039 = vmatprep.subr.bf16.mxu0 0
  %1040 = vmatpush1.bf16.msra.mxu0 0
  %1041 = vmatprep.subr.bf16.mxu0 0
  %1042 = vmatpush1.bf16.msra.mxu0 0
  %1043 = vmatprep.subr.bf16.mxu0 0
  %1044 = vmatpush1.bf16.msra.mxu0 0
  %1045 = vmatprep.subr.bf16.mxu0 0
  %1046 = vmatpush1.bf16.msra.mxu0 0
  %1047 = vmatprep.subr.bf16.mxu0 0
  %1048 = vmatpush1.bf16.msra.mxu0 0
  %1049 = vmatprep.subr.bf16.mxu0 0
  %1050 = vmatpush1.bf16.msra.mxu0 0
  %1051 = vmatprep.mubr.bf16.mxu0 0
  %1052 = vmatmul.mubr.bf16.gmra.mrb[0].mxu0 %v1018
  %v1053 = vpop.f32.mrb[0].mxu0
  %v1054 = vadd.f32 0.0, %v1053
  %v1055 = vpop.f32.mrb[0].mxu0
  %v1056 = vadd.f32 0.0, %v1055
  %v1057 = vpop.f32.mrb[0].mxu0
  %v1058 = vadd.f32 0.0, %v1057
  %v1059 = vpop.f32.mrb[0].mxu0
  %v1060 = vadd.f32 0.0, %v1059
  %1061 = vdwg.mxu0
  %1062 = vmatprep.subr.bf16.mxu0 %v672
  %1063 = vmatpush1.bf16.msra.mxu0 %v671
  %1064 = vmatprep.subr.bf16.mxu0 %v676
  %1065 = vmatpush1.bf16.msra.mxu0 %v675
  %1066 = vmatprep.subr.bf16.mxu0 %v680
  %1067 = vmatpush1.bf16.msra.mxu0 %v679
  %1068 = vmatprep.subr.bf16.mxu0 %v684
  %1069 = vmatpush1.bf16.msra.mxu0 %v683
  %1070 = vmatprep.subr.bf16.mxu0 %v688
  %1071 = vmatpush1.bf16.msra.mxu0 %v687
  %1072 = vmatprep.subr.bf16.mxu0 %v692
  %1073 = vmatpush1.bf16.msra.mxu0 %v691
  %1074 = vmatprep.subr.bf16.mxu0 %v696
  %1075 = vmatpush1.bf16.msra.mxu0 %v695
  %1076 = vmatprep.subr.bf16.mxu0 %v700
  %1077 = vmatpush1.bf16.msra.mxu0 %v699
  %1078 = vmatprep.subr.bf16.mxu0 0
  %1079 = vmatpush1.bf16.msra.mxu0 0
  %1080 = vmatprep.subr.bf16.mxu0 0
  %1081 = vmatpush1.bf16.msra.mxu0 0
  %1082 = vmatprep.subr.bf16.mxu0 0
  %1083 = vmatpush1.bf16.msra.mxu0 0
  %1084 = vmatprep.subr.bf16.mxu0 0
  %1085 = vmatpush1.bf16.msra.mxu0 0
  %1086 = vmatprep.subr.bf16.mxu0 0
  %1087 = vmatpush1.bf16.msra.mxu0 0
  %1088 = vmatprep.subr.bf16.mxu0 0
  %1089 = vmatpush1.bf16.msra.mxu0 0
  %1090 = vmatprep.subr.bf16.mxu0 0
  %1091 = vmatpush1.bf16.msra.mxu0 0
  %1092 = vmatprep.subr.bf16.mxu0 0
  %1093 = vmatpush1.bf16.msra.mxu0 0
  %1094 = vmatprep.mubr.bf16.mxu0 0
  %1095 = vmatmul.mubr.bf16.gmra.mrb[0].mxu0 %v1018
  %v1096 = vpop.f32.mrb[0].mxu0
  %v1097 = vadd.f32 0.0, %v1096
  %v1098 = vpop.f32.mrb[0].mxu0
  %v1099 = vadd.f32 0.0, %v1098
  %v1100 = vpop.f32.mrb[0].mxu0
  %v1101 = vadd.f32 0.0, %v1100
  %v1102 = vpop.f32.mrb[0].mxu0
  %v1103 = vadd.f32 0.0, %v1102
  %1104 = vdwg.mxu0
  %v1105 = vadd.f32 %v365, %v1054
  %v1106 = vadd.f32 %v367, %v1056
  %v1107 = vadd.f32 %v478, %v1097
  %v1108 = vadd.f32 %v480, %v1099
  %v1109 = vadd.f32 %v369, %v1058
  %v1110 = vadd.f32 %v371, %v1060
  %v1111 = vadd.f32 %v482, %v1101
  %v1112 = vadd.f32 %v484, %v1103
  %v1113 = vxor.u32 %v1105, 2147483648
  %v1114 = vxor.u32 %v1109, 2147483648
  %v1115 = vmul.f32 %v1113, 1.442695
  %v1116 = vpow.pop %v1115
  %v1117 = vmul.f32 %v1114, 1.442695
  %v1118 = vpow.pop %v1117
  %v1119 = vadd.f32 %v1116, 1.0
  %v1120 = vadd.f32 %v1118, 1.0
  %v1121 = vrcp.pop %v1119
  %v1122 = vmul.f32 1.0, %v1121
  %v1123 = vrcp.pop %v1120
  %v1124 = vmul.f32 1.0, %v1123
  %v1125 = vxor.u32 %v1106, 2147483648
  %v1126 = vxor.u32 %v1110, 2147483648
  %v1127 = vmul.f32 %v1125, 1.442695
  %v1128 = vpow.pop %v1127
  %v1129 = vmul.f32 %v1126, 1.442695
  %v1130 = vpow.pop %v1129
  %v1131 = vadd.f32 %v1128, 1.0
  %v1132 = vadd.f32 %v1130, 1.0
  %v1133 = vrcp.pop %v1131
  %v1134 = vmul.f32 1.0, %v1133
  %v1135 = vrcp.pop %v1132
  %v1136 = vmul.f32 1.0, %v1135
  %v1137 = vtanh.pop %v1107
  %v1138 = vtanh.pop %v1111
  %v1139 = vxor.u32 %v1108, 2147483648
  %v1140 = vxor.u32 %v1112, 2147483648
  %v1141 = vmul.f32 %v1139, 1.442695
  %v1142 = vpow.pop %v1141
  %v1143 = vmul.f32 %v1140, 1.442695
  %v1144 = vpow.pop %v1143
  %v1145 = vadd.f32 %v1142, 1.0
  %v1146 = vadd.f32 %v1144, 1.0
  %v1147 = vrcp.pop %v1145
  %v1148 = vmul.f32 1.0, %v1147
  %v1149 = vrcp.pop %v1146
  %v1150 = vmul.f32 1.0, %v1149
  %v1151 = vmul.f32 %v1134, %v1012
  %v1152 = vmul.f32 %v1136, %v1013
  %v1153 = vmul.f32 %v1122, %v1137
  %v1154 = vmul.f32 %v1124, %v1138
  %v1155 = vadd.f32 %v1151, %v1153
  %v1156 = vadd.f32 %v1152, %v1154
  %v1157 = vtanh.pop %v1155
  %v1158 = vtanh.pop %v1156
  %v1159 = vmul.f32 %v1148, %v1157
  %v1160 = vmul.f32 %v1150, %v1158
  %v1161 = vpack.c.bf16 %v1160, %v1159
  %1162 = vmatprep.subr.bf16.mxu0 %v670
  %1163 = vmatpush1.bf16.msra.mxu0 %v669
  %1164 = vmatprep.subr.bf16.mxu0 %v674
  %1165 = vmatpush1.bf16.msra.mxu0 %v673
  %1166 = vmatprep.subr.bf16.mxu0 %v678
  %1167 = vmatpush1.bf16.msra.mxu0 %v677
  %1168 = vmatprep.subr.bf16.mxu0 %v682
  %1169 = vmatpush1.bf16.msra.mxu0 %v681
  %1170 = vmatprep.subr.bf16.mxu0 %v686
  %1171 = vmatpush1.bf16.msra.mxu0 %v685
  %1172 = vmatprep.subr.bf16.mxu0 %v690
  %1173 = vmatpush1.bf16.msra.mxu0 %v689
  %1174 = vmatprep.subr.bf16.mxu0 %v694
  %1175 = vmatpush1.bf16.msra.mxu0 %v693
  %1176 = vmatprep.subr.bf16.mxu0 %v698
  %1177 = vmatpush1.bf16.msra.mxu0 %v697
  %1178 = vmatprep.subr.bf16.mxu0 0
  %1179 = vmatpush1.bf16.msra.mxu0 0
  %1180 = vmatprep.subr.bf16.mxu0 0
  %1181 = vmatpush1.bf16.msra.mxu0 0
  %1182 = vmatprep.subr.bf16.mxu0 0
  %1183 = vmatpush1.bf16.msra.mxu0 0
  %1184 = vmatprep.subr.bf16.mxu0 0
  %1185 = vmatpush1.bf16.msra.mxu0 0
  %1186 = vmatprep.subr.bf16.mxu0 0
  %1187 = vmatpush1.bf16.msra.mxu0 0
  %1188 = vmatprep.subr.bf16.mxu0 0
  %1189 = vmatpush1.bf16.msra.mxu0 0
  %1190 = vmatprep.subr.bf16.mxu0 0
  %1191 = vmatpush1.bf16.msra.mxu0 0
  %1192 = vmatprep.subr.bf16.mxu0 0
  %1193 = vmatpush1.bf16.msra.mxu0 0
  %1194 = vmatprep.mubr.bf16.mxu0 0
  %1195 = vmatmul.mubr.bf16.gmra.mrb[0].mxu0 %v1161
  %v1196 = vpop.f32.mrb[0].mxu0
  %v1197 = vadd.f32 0.0, %v1196
  %v1198 = vpop.f32.mrb[0].mxu0
  %v1199 = vadd.f32 0.0, %v1198
  %v1200 = vpop.f32.mrb[0].mxu0
  %v1201 = vadd.f32 0.0, %v1200
  %v1202 = vpop.f32.mrb[0].mxu0
  %v1203 = vadd.f32 0.0, %v1202
  %1204 = vdwg.mxu0
  %1205 = vmatprep.subr.bf16.mxu0 %v672
  %1206 = vmatpush1.bf16.msra.mxu0 %v671
  %1207 = vmatprep.subr.bf16.mxu0 %v676
  %1208 = vmatpush1.bf16.msra.mxu0 %v675
  %1209 = vmatprep.subr.bf16.mxu0 %v680
  %1210 = vmatpush1.bf16.msra.mxu0 %v679
  %1211 = vmatprep.subr.bf16.mxu0 %v684
  %1212 = vmatpush1.bf16.msra.mxu0 %v683
  %1213 = vmatprep.subr.bf16.mxu0 %v688
  %1214 = vmatpush1.bf16.msra.mxu0 %v687
  %1215 = vmatprep.subr.bf16.mxu0 %v692
  %1216 = vmatpush1.bf16.msra.mxu0 %v691
  %1217 = vmatprep.subr.bf16.mxu0 %v696
  %1218 = vmatpush1.bf16.msra.mxu0 %v695
  %1219 = vmatprep.subr.bf16.mxu0 %v700
  %1220 = vmatpush1.bf16.msra.mxu0 %v699
  %1221 = vmatprep.subr.bf16.mxu0 0
  %1222 = vmatpush1.bf16.msra.mxu0 0
  %1223 = vmatprep.subr.bf16.mxu0 0
  %1224 = vmatpush1.bf16.msra.mxu0 0
  %1225 = vmatprep.subr.bf16.mxu0 0
  %1226 = vmatpush1.bf16.msra.mxu0 0
  %1227 = vmatprep.subr.bf16.mxu0 0
  %1228 = vmatpush1.bf16.msra.mxu0 0
  %1229 = vmatprep.subr.bf16.mxu0 0
  %1230 = vmatpush1.bf16.msra.mxu0 0
  %1231 = vmatprep.subr.bf16.mxu0 0
  %1232 = vmatpush1.bf16.msra.mxu0 0
  %1233 = vmatprep.subr.bf16.mxu0 0
  %1234 = vmatpush1.bf16.msra.mxu0 0
  %1235 = vmatprep.subr.bf16.mxu0 0
  %1236 = vmatpush1.bf16.msra.mxu0 0
  %1237 = vmatprep.mubr.bf16.mxu0 0
  %1238 = vmatmul.mubr.bf16.gmra.mrb[0].mxu0 %v1161
  %v1239 = vpop.f32.mrb[0].mxu0
  %v1240 = vadd.f32 0.0, %v1239
  %v1241 = vpop.f32.mrb[0].mxu0
  %v1242 = vadd.f32 0.0, %v1241
  %v1243 = vpop.f32.mrb[0].mxu0
  %v1244 = vadd.f32 0.0, %v1243
  %v1245 = vpop.f32.mrb[0].mxu0
  %v1246 = vadd.f32 0.0, %v1245
  %1247 = vdwg.mxu0
  %v1248 = vadd.f32 %v375, %v1197
  %v1249 = vadd.f32 %v377, %v1199
  %v1250 = vadd.f32 %v488, %v1240
  %v1251 = vadd.f32 %v490, %v1242
  %v1252 = vadd.f32 %v379, %v1201
  %v1253 = vadd.f32 %v381, %v1203
  %v1254 = vadd.f32 %v492, %v1244
  %v1255 = vadd.f32 %v494, %v1246
  %v1256 = vxor.u32 %v1248, 2147483648
  %v1257 = vxor.u32 %v1252, 2147483648
  %v1258 = vmul.f32 %v1256, 1.442695
  %v1259 = vpow.pop %v1258
  %v1260 = vmul.f32 %v1257, 1.442695
  %v1261 = vpow.pop %v1260
  %v1262 = vadd.f32 %v1259, 1.0
  %v1263 = vadd.f32 %v1261, 1.0
  %v1264 = vrcp.pop %v1262
  %v1265 = vmul.f32 1.0, %v1264
  %v1266 = vrcp.pop %v1263
  %v1267 = vmul.f32 1.0, %v1266
  %v1268 = vxor.u32 %v1249, 2147483648
  %v1269 = vxor.u32 %v1253, 2147483648
  %v1270 = vmul.f32 %v1268, 1.442695
  %v1271 = vpow.pop %v1270
  %v1272 = vmul.f32 %v1269, 1.442695
  %v1273 = vpow.pop %v1272
  %v1274 = vadd.f32 %v1271, 1.0
  %v1275 = vadd.f32 %v1273, 1.0
  %v1276 = vrcp.pop %v1274
  %v1277 = vmul.f32 1.0, %v1276
  %v1278 = vrcp.pop %v1275
  %v1279 = vmul.f32 1.0, %v1278
  %v1280 = vtanh.pop %v1250
  %v1281 = vtanh.pop %v1254
  %v1282 = vxor.u32 %v1251, 2147483648
  %v1283 = vxor.u32 %v1255, 2147483648
  %v1284 = vmul.f32 %v1282, 1.442695
  %v1285 = vpow.pop %v1284
  %v1286 = vmul.f32 %v1283, 1.442695
  %v1287 = vpow.pop %v1286
  %v1288 = vadd.f32 %v1285, 1.0
  %v1289 = vadd.f32 %v1287, 1.0
  %v1290 = vrcp.pop %v1288
  %v1291 = vmul.f32 1.0, %v1290
  %v1292 = vrcp.pop %v1289
  %v1293 = vmul.f32 1.0, %v1292
  %v1294 = vmul.f32 %v1277, %v1155
  %v1295 = vmul.f32 %v1279, %v1156
  %v1296 = vmul.f32 %v1265, %v1280
  %v1297 = vmul.f32 %v1267, %v1281
  %v1298 = vadd.f32 %v1294, %v1296
  %v1299 = vadd.f32 %v1295, %v1297
  %v1300 = vtanh.pop %v1298
  %v1301 = vtanh.pop %v1299
  %v1302 = vmul.f32 %v1291, %v1300
  %v1303 = vmul.f32 %v1293, %v1301
  %v1304 = vpack.c.bf16 %v1303, %v1302
  %1305 = vmatprep.subr.bf16.mxu0 %v670
  %1306 = vmatpush1.bf16.msra.mxu0 %v669
  %1307 = vmatprep.subr.bf16.mxu0 %v674
  %1308 = vmatpush1.bf16.msra.mxu0 %v673
  %1309 = vmatprep.subr.bf16.mxu0 %v678
  %1310 = vmatpush1.bf16.msra.mxu0 %v677
  %1311 = vmatprep.subr.bf16.mxu0 %v682
  %1312 = vmatpush1.bf16.msra.mxu0 %v681
  %1313 = vmatprep.subr.bf16.mxu0 %v686
  %1314 = vmatpush1.bf16.msra.mxu0 %v685
  %1315 = vmatprep.subr.bf16.mxu0 %v690
  %1316 = vmatpush1.bf16.msra.mxu0 %v689
  %1317 = vmatprep.subr.bf16.mxu0 %v694
  %1318 = vmatpush1.bf16.msra.mxu0 %v693
  %1319 = vmatprep.subr.bf16.mxu0 %v698
  %1320 = vmatpush1.bf16.msra.mxu0 %v697
  %1321 = vmatprep.subr.bf16.mxu0 0
  %1322 = vmatpush1.bf16.msra.mxu0 0
  %1323 = vmatprep.subr.bf16.mxu0 0
  %1324 = vmatpush1.bf16.msra.mxu0 0
  %1325 = vmatprep.subr.bf16.mxu0 0
  %1326 = vmatpush1.bf16.msra.mxu0 0
  %1327 = vmatprep.subr.bf16.mxu0 0
  %1328 = vmatpush1.bf16.msra.mxu0 0
  %1329 = vmatprep.subr.bf16.mxu0 0
  %1330 = vmatpush1.bf16.msra.mxu0 0
  %1331 = vmatprep.subr.bf16.mxu0 0
  %1332 = vmatpush1.bf16.msra.mxu0 0
  %1333 = vmatprep.subr.bf16.mxu0 0
  %1334 = vmatpush1.bf16.msra.mxu0 0
  %1335 = vmatprep.subr.bf16.mxu0 0
  %1336 = vmatpush1.bf16.msra.mxu0 0
  %1337 = vmatprep.mubr.bf16.mxu0 0
  %1338 = vmatmul.mubr.bf16.gmra.mrb[0].mxu0 %v1304
  %v1339 = vpop.f32.mrb[0].mxu0
  %v1340 = vadd.f32 0.0, %v1339
  %v1341 = vpop.f32.mrb[0].mxu0
  %v1342 = vadd.f32 0.0, %v1341
  %v1343 = vpop.f32.mrb[0].mxu0
  %v1344 = vadd.f32 0.0, %v1343
  %v1345 = vpop.f32.mrb[0].mxu0
  %v1346 = vadd.f32 0.0, %v1345
  %1347 = vdwg.mxu0
  %1348 = vmatprep.subr.bf16.mxu0 %v672
  %1349 = vmatpush1.bf16.msra.mxu0 %v671
  %1350 = vmatprep.subr.bf16.mxu0 %v676
  %1351 = vmatpush1.bf16.msra.mxu0 %v675
  %1352 = vmatprep.subr.bf16.mxu0 %v680
  %1353 = vmatpush1.bf16.msra.mxu0 %v679
  %1354 = vmatprep.subr.bf16.mxu0 %v684
  %1355 = vmatpush1.bf16.msra.mxu0 %v683
  %1356 = vmatprep.subr.bf16.mxu0 %v688
  %1357 = vmatpush1.bf16.msra.mxu0 %v687
  %1358 = vmatprep.subr.bf16.mxu0 %v692
  %1359 = vmatpush1.bf16.msra.mxu0 %v691
  %1360 = vmatprep.subr.bf16.mxu0 %v696
  %1361 = vmatpush1.bf16.msra.mxu0 %v695
  %1362 = vmatprep.subr.bf16.mxu0 %v700
  %1363 = vmatpush1.bf16.msra.mxu0 %v699
  %1364 = vmatprep.subr.bf16.mxu0 0
  %1365 = vmatpush1.bf16.msra.mxu0 0
  %1366 = vmatprep.subr.bf16.mxu0 0
  %1367 = vmatpush1.bf16.msra.mxu0 0
  %1368 = vmatprep.subr.bf16.mxu0 0
  %1369 = vmatpush1.bf16.msra.mxu0 0
  %1370 = vmatprep.subr.bf16.mxu0 0
  %1371 = vmatpush1.bf16.msra.mxu0 0
  %1372 = vmatprep.subr.bf16.mxu0 0
  %1373 = vmatpush1.bf16.msra.mxu0 0
  %1374 = vmatprep.subr.bf16.mxu0 0
  %1375 = vmatpush1.bf16.msra.mxu0 0
  %1376 = vmatprep.subr.bf16.mxu0 0
  %1377 = vmatpush1.bf16.msra.mxu0 0
  %1378 = vmatprep.subr.bf16.mxu0 0
  %1379 = vmatpush1.bf16.msra.mxu0 0
  %1380 = vmatprep.mubr.bf16.mxu0 0
  %1381 = vmatmul.mubr.bf16.gmra.mrb[0].mxu0 %v1304
  %v1382 = vpop.f32.mrb[0].mxu0
  %v1383 = vadd.f32 0.0, %v1382
  %v1384 = vpop.f32.mrb[0].mxu0
  %v1385 = vadd.f32 0.0, %v1384
  %v1386 = vpop.f32.mrb[0].mxu0
  %v1387 = vadd.f32 0.0, %v1386
  %v1388 = vpop.f32.mrb[0].mxu0
  %v1389 = vadd.f32 0.0, %v1388
  %1390 = vdwg.mxu0
  %v1391 = vadd.f32 %v385, %v1340
  %v1392 = vadd.f32 %v387, %v1342
  %v1393 = vadd.f32 %v498, %v1383
  %v1394 = vadd.f32 %v500, %v1385
  %v1395 = vadd.f32 %v389, %v1344
  %v1396 = vadd.f32 %v391, %v1346
  %v1397 = vadd.f32 %v502, %v1387
  %v1398 = vadd.f32 %v504, %v1389
  %v1399 = vxor.u32 %v1391, 2147483648
  %v1400 = vxor.u32 %v1395, 2147483648
  %v1401 = vmul.f32 %v1399, 1.442695
  %v1402 = vpow.pop %v1401
  %v1403 = vmul.f32 %v1400, 1.442695
  %v1404 = vpow.pop %v1403
  %v1405 = vadd.f32 %v1402, 1.0
  %v1406 = vadd.f32 %v1404, 1.0
  %v1407 = vrcp.pop %v1405
  %v1408 = vmul.f32 1.0, %v1407
  %v1409 = vrcp.pop %v1406
  %v1410 = vmul.f32 1.0, %v1409
  %v1411 = vxor.u32 %v1392, 2147483648
  %v1412 = vxor.u32 %v1396, 2147483648
  %v1413 = vmul.f32 %v1411, 1.442695
  %v1414 = vpow.pop %v1413
  %v1415 = vmul.f32 %v1412, 1.442695
  %v1416 = vpow.pop %v1415
  %v1417 = vadd.f32 %v1414, 1.0
  %v1418 = vadd.f32 %v1416, 1.0
  %v1419 = vrcp.pop %v1417
  %v1420 = vmul.f32 1.0, %v1419
  %v1421 = vrcp.pop %v1418
  %v1422 = vmul.f32 1.0, %v1421
  %v1423 = vtanh.pop %v1393
  %v1424 = vtanh.pop %v1397
  %v1425 = vxor.u32 %v1394, 2147483648
  %v1426 = vxor.u32 %v1398, 2147483648
  %v1427 = vmul.f32 %v1425, 1.442695
  %v1428 = vpow.pop %v1427
  %v1429 = vmul.f32 %v1426, 1.442695
  %v1430 = vpow.pop %v1429
  %v1431 = vadd.f32 %v1428, 1.0
  %v1432 = vadd.f32 %v1430, 1.0
  %v1433 = vrcp.pop %v1431
  %v1434 = vmul.f32 1.0, %v1433
  %v1435 = vrcp.pop %v1432
  %v1436 = vmul.f32 1.0, %v1435
  %v1437 = vmul.f32 %v1420, %v1298
  %v1438 = vmul.f32 %v1422, %v1299
  %v1439 = vmul.f32 %v1408, %v1423
  %v1440 = vmul.f32 %v1410, %v1424
  %v1441 = vadd.f32 %v1437, %v1439
  %v1442 = vadd.f32 %v1438, %v1440
  %v1443 = vtanh.pop %v1441
  %v1444 = vtanh.pop %v1442
  %v1445 = vmul.f32 %v1434, %v1443
  %v1446 = vmul.f32 %v1436, %v1444
  %v1447 = vpack.c.bf16 %v1446, %v1445
  %1448 = vmatprep.subr.bf16.mxu0 %v670
  %1449 = vmatpush1.bf16.msra.mxu0 %v669
  %1450 = vmatprep.subr.bf16.mxu0 %v674
  %1451 = vmatpush1.bf16.msra.mxu0 %v673
  %1452 = vmatprep.subr.bf16.mxu0 %v678
  %1453 = vmatpush1.bf16.msra.mxu0 %v677
  %1454 = vmatprep.subr.bf16.mxu0 %v682
  %1455 = vmatpush1.bf16.msra.mxu0 %v681
  %1456 = vmatprep.subr.bf16.mxu0 %v686
  %1457 = vmatpush1.bf16.msra.mxu0 %v685
  %1458 = vmatprep.subr.bf16.mxu0 %v690
  %1459 = vmatpush1.bf16.msra.mxu0 %v689
  %1460 = vmatprep.subr.bf16.mxu0 %v694
  %1461 = vmatpush1.bf16.msra.mxu0 %v693
  %1462 = vmatprep.subr.bf16.mxu0 %v698
  %1463 = vmatpush1.bf16.msra.mxu0 %v697
  %1464 = vmatprep.subr.bf16.mxu0 0
  %1465 = vmatpush1.bf16.msra.mxu0 0
  %1466 = vmatprep.subr.bf16.mxu0 0
  %1467 = vmatpush1.bf16.msra.mxu0 0
  %1468 = vmatprep.subr.bf16.mxu0 0
  %1469 = vmatpush1.bf16.msra.mxu0 0
  %1470 = vmatprep.subr.bf16.mxu0 0
  %1471 = vmatpush1.bf16.msra.mxu0 0
  %1472 = vmatprep.subr.bf16.mxu0 0
  %1473 = vmatpush1.bf16.msra.mxu0 0
  %1474 = vmatprep.subr.bf16.mxu0 0
  %1475 = vmatpush1.bf16.msra.mxu0 0
  %1476 = vmatprep.subr.bf16.mxu0 0
  %1477 = vmatpush1.bf16.msra.mxu0 0
  %1478 = vmatprep.subr.bf16.mxu0 0
  %1479 = vmatpush1.bf16.msra.mxu0 0
  %1480 = vmatprep.mubr.bf16.mxu0 0
  %1481 = vmatmul.mubr.bf16.gmra.mrb[0].mxu0 %v1447
  %v1482 = vpop.f32.mrb[0].mxu0
  %v1483 = vadd.f32 0.0, %v1482
  %v1484 = vpop.f32.mrb[0].mxu0
  %v1485 = vadd.f32 0.0, %v1484
  %v1486 = vpop.f32.mrb[0].mxu0
  %v1487 = vadd.f32 0.0, %v1486
  %v1488 = vpop.f32.mrb[0].mxu0
  %v1489 = vadd.f32 0.0, %v1488
  %1490 = vdwg.mxu0
  %1491 = vmatprep.subr.bf16.mxu0 %v672
  %1492 = vmatpush1.bf16.msra.mxu0 %v671
  %1493 = vmatprep.subr.bf16.mxu0 %v676
  %1494 = vmatpush1.bf16.msra.mxu0 %v675
  %1495 = vmatprep.subr.bf16.mxu0 %v680
  %1496 = vmatpush1.bf16.msra.mxu0 %v679
  %1497 = vmatprep.subr.bf16.mxu0 %v684
  %1498 = vmatpush1.bf16.msra.mxu0 %v683
  %1499 = vmatprep.subr.bf16.mxu0 %v688
  %1500 = vmatpush1.bf16.msra.mxu0 %v687
  %1501 = vmatprep.subr.bf16.mxu0 %v692
  %1502 = vmatpush1.bf16.msra.mxu0 %v691
  %1503 = vmatprep.subr.bf16.mxu0 %v696
  %1504 = vmatpush1.bf16.msra.mxu0 %v695
  %1505 = vmatprep.subr.bf16.mxu0 %v700
  %1506 = vmatpush1.bf16.msra.mxu0 %v699
  %1507 = vmatprep.subr.bf16.mxu0 0
  %1508 = vmatpush1.bf16.msra.mxu0 0
  %1509 = vmatprep.subr.bf16.mxu0 0
  %1510 = vmatpush1.bf16.msra.mxu0 0
  %1511 = vmatprep.subr.bf16.mxu0 0
  %1512 = vmatpush1.bf16.msra.mxu0 0
  %1513 = vmatprep.subr.bf16.mxu0 0
  %1514 = vmatpush1.bf16.msra.mxu0 0
  %1515 = vmatprep.subr.bf16.mxu0 0
  %1516 = vmatpush1.bf16.msra.mxu0 0
  %1517 = vmatprep.subr.bf16.mxu0 0
  %1518 = vmatpush1.bf16.msra.mxu0 0
  %1519 = vmatprep.subr.bf16.mxu0 0
  %1520 = vmatpush1.bf16.msra.mxu0 0
  %1521 = vmatprep.subr.bf16.mxu0 0
  %1522 = vmatpush1.bf16.msra.mxu0 0
  %1523 = vmatprep.mubr.bf16.mxu0 0
  %1524 = vmatmul.mubr.bf16.gmra.mrb[0].mxu0 %v1447
  %v1525 = vpop.f32.mrb[0].mxu0
  %v1526 = vadd.f32 0.0, %v1525
  %v1527 = vpop.f32.mrb[0].mxu0
  %v1528 = vadd.f32 0.0, %v1527
  %v1529 = vpop.f32.mrb[0].mxu0
  %v1530 = vadd.f32 0.0, %v1529
  %v1531 = vpop.f32.mrb[0].mxu0
  %v1532 = vadd.f32 0.0, %v1531
  %1533 = vdwg.mxu0
  %v1534 = vadd.f32 %v395, %v1483
  %v1535 = vadd.f32 %v397, %v1485
  %v1536 = vadd.f32 %v508, %v1526
  %v1537 = vadd.f32 %v510, %v1528
  %v1538 = vadd.f32 %v399, %v1487
  %v1539 = vadd.f32 %v401, %v1489
  %v1540 = vadd.f32 %v512, %v1530
  %v1541 = vadd.f32 %v514, %v1532
  %v1542 = vxor.u32 %v1534, 2147483648
  %v1543 = vxor.u32 %v1538, 2147483648
  %v1544 = vmul.f32 %v1542, 1.442695
  %v1545 = vpow.pop %v1544
  %v1546 = vmul.f32 %v1543, 1.442695
  %v1547 = vpow.pop %v1546
  %v1548 = vadd.f32 %v1545, 1.0
  %v1549 = vadd.f32 %v1547, 1.0
  %v1550 = vrcp.pop %v1548
  %v1551 = vmul.f32 1.0, %v1550
  %v1552 = vrcp.pop %v1549
  %v1553 = vmul.f32 1.0, %v1552
  %v1554 = vxor.u32 %v1535, 2147483648
  %v1555 = vxor.u32 %v1539, 2147483648
  %v1556 = vmul.f32 %v1554, 1.442695
  %v1557 = vpow.pop %v1556
  %v1558 = vmul.f32 %v1555, 1.442695
  %v1559 = vpow.pop %v1558
  %v1560 = vadd.f32 %v1557, 1.0
  %v1561 = vadd.f32 %v1559, 1.0
  %v1562 = vrcp.pop %v1560
  %v1563 = vmul.f32 1.0, %v1562
  %v1564 = vrcp.pop %v1561
  %v1565 = vmul.f32 1.0, %v1564
  %v1566 = vtanh.pop %v1536
  %v1567 = vtanh.pop %v1540
  %v1568 = vxor.u32 %v1537, 2147483648
  %v1569 = vxor.u32 %v1541, 2147483648
  %v1570 = vmul.f32 %v1568, 1.442695
  %v1571 = vpow.pop %v1570
  %v1572 = vmul.f32 %v1569, 1.442695
  %v1573 = vpow.pop %v1572
  %v1574 = vadd.f32 %v1571, 1.0
  %v1575 = vadd.f32 %v1573, 1.0
  %v1576 = vrcp.pop %v1574
  %v1577 = vmul.f32 1.0, %v1576
  %v1578 = vrcp.pop %v1575
  %v1579 = vmul.f32 1.0, %v1578
  %v1580 = vmul.f32 %v1563, %v1441
  %v1581 = vmul.f32 %v1565, %v1442
  %v1582 = vmul.f32 %v1551, %v1566
  %v1583 = vmul.f32 %v1553, %v1567
  %v1584 = vadd.f32 %v1580, %v1582
  %v1585 = vadd.f32 %v1581, %v1583
  %v1586 = vtanh.pop %v1584
  %v1587 = vtanh.pop %v1585
  %v1588 = vmul.f32 %v1577, %v1586
  %v1589 = vmul.f32 %v1579, %v1587
  %v1590 = vpack.c.bf16 %v1589, %v1588
  %1591 = vmatprep.subr.bf16.mxu0 %v670
  %1592 = vmatpush1.bf16.msra.mxu0 %v669
  %1593 = vmatprep.subr.bf16.mxu0 %v674
  %1594 = vmatpush1.bf16.msra.mxu0 %v673
  %1595 = vmatprep.subr.bf16.mxu0 %v678
  %1596 = vmatpush1.bf16.msra.mxu0 %v677
  %1597 = vmatprep.subr.bf16.mxu0 %v682
  %1598 = vmatpush1.bf16.msra.mxu0 %v681
  %1599 = vmatprep.subr.bf16.mxu0 %v686
  %1600 = vmatpush1.bf16.msra.mxu0 %v685
  %1601 = vmatprep.subr.bf16.mxu0 %v690
  %1602 = vmatpush1.bf16.msra.mxu0 %v689
  %1603 = vmatprep.subr.bf16.mxu0 %v694
  %1604 = vmatpush1.bf16.msra.mxu0 %v693
  %1605 = vmatprep.subr.bf16.mxu0 %v698
  %1606 = vmatpush1.bf16.msra.mxu0 %v697
  %1607 = vmatprep.subr.bf16.mxu0 0
  %1608 = vmatpush1.bf16.msra.mxu0 0
  %1609 = vmatprep.subr.bf16.mxu0 0
  %1610 = vmatpush1.bf16.msra.mxu0 0
  %1611 = vmatprep.subr.bf16.mxu0 0
  %1612 = vmatpush1.bf16.msra.mxu0 0
  %1613 = vmatprep.subr.bf16.mxu0 0
  %1614 = vmatpush1.bf16.msra.mxu0 0
  %1615 = vmatprep.subr.bf16.mxu0 0
  %1616 = vmatpush1.bf16.msra.mxu0 0
  %1617 = vmatprep.subr.bf16.mxu0 0
  %1618 = vmatpush1.bf16.msra.mxu0 0
  %1619 = vmatprep.subr.bf16.mxu0 0
  %1620 = vmatpush1.bf16.msra.mxu0 0
  %1621 = vmatprep.subr.bf16.mxu0 0
  %1622 = vmatpush1.bf16.msra.mxu0 0
  %1623 = vmatprep.mubr.bf16.mxu0 0
  %1624 = vmatmul.mubr.bf16.gmra.mrb[0].mxu0 %v1590
  %v1625 = vpop.f32.mrb[0].mxu0
  %v1626 = vadd.f32 0.0, %v1625
  %v1627 = vpop.f32.mrb[0].mxu0
  %v1628 = vadd.f32 0.0, %v1627
  %v1629 = vpop.f32.mrb[0].mxu0
  %v1630 = vadd.f32 0.0, %v1629
  %v1631 = vpop.f32.mrb[0].mxu0
  %v1632 = vadd.f32 0.0, %v1631
  %1633 = vdwg.mxu0
  %1634 = vmatprep.subr.bf16.mxu0 %v672
  %1635 = vmatpush1.bf16.msra.mxu0 %v671
  %1636 = vmatprep.subr.bf16.mxu0 %v676
  %1637 = vmatpush1.bf16.msra.mxu0 %v675
  %1638 = vmatprep.subr.bf16.mxu0 %v680
  %1639 = vmatpush1.bf16.msra.mxu0 %v679
  %1640 = vmatprep.subr.bf16.mxu0 %v684
  %1641 = vmatpush1.bf16.msra.mxu0 %v683
  %1642 = vmatprep.subr.bf16.mxu0 %v688
  %1643 = vmatpush1.bf16.msra.mxu0 %v687
  %1644 = vmatprep.subr.bf16.mxu0 %v692
  %1645 = vmatpush1.bf16.msra.mxu0 %v691
  %1646 = vmatprep.subr.bf16.mxu0 %v696
  %1647 = vmatpush1.bf16.msra.mxu0 %v695
  %1648 = vmatprep.subr.bf16.mxu0 %v700
  %1649 = vmatpush1.bf16.msra.mxu0 %v699
  %1650 = vmatprep.subr.bf16.mxu0 0
  %1651 = vmatpush1.bf16.msra.mxu0 0
  %1652 = vmatprep.subr.bf16.mxu0 0
  %1653 = vmatpush1.bf16.msra.mxu0 0
  %1654 = vmatprep.subr.bf16.mxu0 0
  %1655 = vmatpush1.bf16.msra.mxu0 0
  %1656 = vmatprep.subr.bf16.mxu0 0
  %1657 = vmatpush1.bf16.msra.mxu0 0
  %1658 = vmatprep.subr.bf16.mxu0 0
  %1659 = vmatpush1.bf16.msra.mxu0 0
  %1660 = vmatprep.subr.bf16.mxu0 0
  %1661 = vmatpush1.bf16.msra.mxu0 0
  %1662 = vmatprep.subr.bf16.mxu0 0
  %1663 = vmatpush1.bf16.msra.mxu0 0
  %1664 = vmatprep.subr.bf16.mxu0 0
  %1665 = vmatpush1.bf16.msra.mxu0 0
  %1666 = vmatprep.mubr.bf16.mxu0 0
  %1667 = vmatmul.mubr.bf16.gmra.mrb[0].mxu0 %v1590
  %v1668 = vpop.f32.mrb[0].mxu0
  %v1669 = vadd.f32 0.0, %v1668
  %v1670 = vpop.f32.mrb[0].mxu0
  %v1671 = vadd.f32 0.0, %v1670
  %v1672 = vpop.f32.mrb[0].mxu0
  %v1673 = vadd.f32 0.0, %v1672
  %v1674 = vpop.f32.mrb[0].mxu0
  %v1675 = vadd.f32 0.0, %v1674
  %1676 = vdwg.mxu0
  %v1677 = vadd.f32 %v405, %v1626
  %v1678 = vadd.f32 %v407, %v1628
  %v1679 = vadd.f32 %v518, %v1669
  %v1680 = vadd.f32 %v520, %v1671
  %v1681 = vadd.f32 %v409, %v1630
  %v1682 = vadd.f32 %v411, %v1632
  %v1683 = vadd.f32 %v522, %v1673
  %v1684 = vadd.f32 %v524, %v1675
  %v1685 = vxor.u32 %v1677, 2147483648
  %v1686 = vxor.u32 %v1681, 2147483648
  %v1687 = vmul.f32 %v1685, 1.442695
  %v1688 = vpow.pop %v1687
  %v1689 = vmul.f32 %v1686, 1.442695
  %v1690 = vpow.pop %v1689
  %v1691 = vadd.f32 %v1688, 1.0
  %v1692 = vadd.f32 %v1690, 1.0
  %v1693 = vrcp.pop %v1691
  %v1694 = vmul.f32 1.0, %v1693
  %v1695 = vrcp.pop %v1692
  %v1696 = vmul.f32 1.0, %v1695
  %v1697 = vxor.u32 %v1678, 2147483648
  %v1698 = vxor.u32 %v1682, 2147483648
  %v1699 = vmul.f32 %v1697, 1.442695
  %v1700 = vpow.pop %v1699
  %v1701 = vmul.f32 %v1698, 1.442695
  %v1702 = vpow.pop %v1701
  %v1703 = vadd.f32 %v1700, 1.0
  %v1704 = vadd.f32 %v1702, 1.0
  %v1705 = vrcp.pop %v1703
  %v1706 = vmul.f32 1.0, %v1705
  %v1707 = vrcp.pop %v1704
  %v1708 = vmul.f32 1.0, %v1707
  %v1709 = vtanh.pop %v1679
  %v1710 = vtanh.pop %v1683
  %v1711 = vxor.u32 %v1680, 2147483648
  %v1712 = vxor.u32 %v1684, 2147483648
  %v1713 = vmul.f32 %v1711, 1.442695
  %v1714 = vpow.pop %v1713
  %v1715 = vmul.f32 %v1712, 1.442695
  %v1716 = vpow.pop %v1715
  %v1717 = vadd.f32 %v1714, 1.0
  %v1718 = vadd.f32 %v1716, 1.0
  %v1719 = vrcp.pop %v1717
  %v1720 = vmul.f32 1.0, %v1719
  %v1721 = vrcp.pop %v1718
  %v1722 = vmul.f32 1.0, %v1721
  %v1723 = vmul.f32 %v1706, %v1584
  %v1724 = vmul.f32 %v1708, %v1585
  %v1725 = vmul.f32 %v1694, %v1709
  %v1726 = vmul.f32 %v1696, %v1710
  %v1727 = vadd.f32 %v1723, %v1725
  %v1728 = vadd.f32 %v1724, %v1726
  %v1729 = vtanh.pop %v1727
  %v1730 = vtanh.pop %v1728
  %v1731 = vmul.f32 %v1720, %v1729
  %v1732 = vmul.f32 %v1722, %v1730
  %v1733 = vpack.c.bf16 %v1732, %v1731
  %1734 = vmatprep.subr.bf16.mxu0 %v670
  %1735 = vmatpush1.bf16.msra.mxu0 %v669
  %1736 = vmatprep.subr.bf16.mxu0 %v674
  %1737 = vmatpush1.bf16.msra.mxu0 %v673
  %1738 = vmatprep.subr.bf16.mxu0 %v678
  %1739 = vmatpush1.bf16.msra.mxu0 %v677
  %1740 = vmatprep.subr.bf16.mxu0 %v682
  %1741 = vmatpush1.bf16.msra.mxu0 %v681
  %1742 = vmatprep.subr.bf16.mxu0 %v686
  %1743 = vmatpush1.bf16.msra.mxu0 %v685
  %1744 = vmatprep.subr.bf16.mxu0 %v690
  %1745 = vmatpush1.bf16.msra.mxu0 %v689
  %1746 = vmatprep.subr.bf16.mxu0 %v694
  %1747 = vmatpush1.bf16.msra.mxu0 %v693
  %1748 = vmatprep.subr.bf16.mxu0 %v698
  %1749 = vmatpush1.bf16.msra.mxu0 %v697
  %1750 = vmatprep.subr.bf16.mxu0 0
  %1751 = vmatpush1.bf16.msra.mxu0 0
  %1752 = vmatprep.subr.bf16.mxu0 0
  %1753 = vmatpush1.bf16.msra.mxu0 0
  %1754 = vmatprep.subr.bf16.mxu0 0
  %1755 = vmatpush1.bf16.msra.mxu0 0
  %1756 = vmatprep.subr.bf16.mxu0 0
  %1757 = vmatpush1.bf16.msra.mxu0 0
  %1758 = vmatprep.subr.bf16.mxu0 0
  %1759 = vmatpush1.bf16.msra.mxu0 0
  %1760 = vmatprep.subr.bf16.mxu0 0
  %1761 = vmatpush1.bf16.msra.mxu0 0
  %1762 = vmatprep.subr.bf16.mxu0 0
  %1763 = vmatpush1.bf16.msra.mxu0 0
  %1764 = vmatprep.subr.bf16.mxu0 0
  %1765 = vmatpush1.bf16.msra.mxu0 0
  %1766 = vmatprep.mubr.bf16.mxu0 0
  %1767 = vmatmul.mubr.bf16.gmra.mrb[0].mxu0 %v1733
  %v1768 = vpop.f32.mrb[0].mxu0
  %v1769 = vadd.f32 0.0, %v1768
  %v1770 = vpop.f32.mrb[0].mxu0
  %v1771 = vadd.f32 0.0, %v1770
  %v1772 = vpop.f32.mrb[0].mxu0
  %v1773 = vadd.f32 0.0, %v1772
  %v1774 = vpop.f32.mrb[0].mxu0
  %v1775 = vadd.f32 0.0, %v1774
  %1776 = vdwg.mxu0
  %1777 = vmatprep.subr.bf16.mxu0 %v672
  %1778 = vmatpush1.bf16.msra.mxu0 %v671
  %1779 = vmatprep.subr.bf16.mxu0 %v676
  %1780 = vmatpush1.bf16.msra.mxu0 %v675
  %1781 = vmatprep.subr.bf16.mxu0 %v680
  %1782 = vmatpush1.bf16.msra.mxu0 %v679
  %1783 = vmatprep.subr.bf16.mxu0 %v684
  %1784 = vmatpush1.bf16.msra.mxu0 %v683
  %1785 = vmatprep.subr.bf16.mxu0 %v688
  %1786 = vmatpush1.bf16.msra.mxu0 %v687
  %1787 = vmatprep.subr.bf16.mxu0 %v692
  %1788 = vmatpush1.bf16.msra.mxu0 %v691
  %1789 = vmatprep.subr.bf16.mxu0 %v696
  %1790 = vmatpush1.bf16.msra.mxu0 %v695
  %1791 = vmatprep.subr.bf16.mxu0 %v700
  %1792 = vmatpush1.bf16.msra.mxu0 %v699
  %1793 = vmatprep.subr.bf16.mxu0 0
  %1794 = vmatpush1.bf16.msra.mxu0 0
  %1795 = vmatprep.subr.bf16.mxu0 0
  %1796 = vmatpush1.bf16.msra.mxu0 0
  %1797 = vmatprep.subr.bf16.mxu0 0
  %1798 = vmatpush1.bf16.msra.mxu0 0
  %1799 = vmatprep.subr.bf16.mxu0 0
  %1800 = vmatpush1.bf16.msra.mxu0 0
  %1801 = vmatprep.subr.bf16.mxu0 0
  %1802 = vmatpush1.bf16.msra.mxu0 0
  %1803 = vmatprep.subr.bf16.mxu0 0
  %1804 = vmatpush1.bf16.msra.mxu0 0
  %1805 = vmatprep.subr.bf16.mxu0 0
  %1806 = vmatpush1.bf16.msra.mxu0 0
  %1807 = vmatprep.subr.bf16.mxu0 0
  %1808 = vmatpush1.bf16.msra.mxu0 0
  %1809 = vmatprep.mubr.bf16.mxu0 0
  %1810 = vmatmul.mubr.bf16.gmra.mrb[0].mxu0 %v1733
  %v1811 = vpop.f32.mrb[0].mxu0
  %v1812 = vadd.f32 0.0, %v1811
  %v1813 = vpop.f32.mrb[0].mxu0
  %v1814 = vadd.f32 0.0, %v1813
  %v1815 = vpop.f32.mrb[0].mxu0
  %v1816 = vadd.f32 0.0, %v1815
  %v1817 = vpop.f32.mrb[0].mxu0
  %v1818 = vadd.f32 0.0, %v1817
  %1819 = vdwg.mxu0
  %v1820 = vadd.f32 %v415, %v1769
  %v1821 = vadd.f32 %v417, %v1771
  %v1822 = vadd.f32 %v528, %v1812
  %v1823 = vadd.f32 %v530, %v1814
  %v1824 = vadd.f32 %v419, %v1773
  %v1825 = vadd.f32 %v421, %v1775
  %v1826 = vadd.f32 %v532, %v1816
  %v1827 = vadd.f32 %v534, %v1818
  %v1828 = vxor.u32 %v1820, 2147483648
  %v1829 = vxor.u32 %v1824, 2147483648
  %v1830 = vmul.f32 %v1828, 1.442695
  %v1831 = vpow.pop %v1830
  %v1832 = vmul.f32 %v1829, 1.442695
  %v1833 = vpow.pop %v1832
  %v1834 = vadd.f32 %v1831, 1.0
  %v1835 = vadd.f32 %v1833, 1.0
  %v1836 = vrcp.pop %v1834
  %v1837 = vmul.f32 1.0, %v1836
  %v1838 = vrcp.pop %v1835
  %v1839 = vmul.f32 1.0, %v1838
  %v1840 = vxor.u32 %v1821, 2147483648
  %v1841 = vxor.u32 %v1825, 2147483648
  %v1842 = vmul.f32 %v1840, 1.442695
  %v1843 = vpow.pop %v1842
  %v1844 = vmul.f32 %v1841, 1.442695
  %v1845 = vpow.pop %v1844
  %v1846 = vadd.f32 %v1843, 1.0
  %v1847 = vadd.f32 %v1845, 1.0
  %v1848 = vrcp.pop %v1846
  %v1849 = vmul.f32 1.0, %v1848
  %v1850 = vrcp.pop %v1847
  %v1851 = vmul.f32 1.0, %v1850
  %v1852 = vtanh.pop %v1822
  %v1853 = vtanh.pop %v1826
  %v1854 = vxor.u32 %v1823, 2147483648
  %v1855 = vxor.u32 %v1827, 2147483648
  %v1856 = vmul.f32 %v1854, 1.442695
  %v1857 = vpow.pop %v1856
  %v1858 = vmul.f32 %v1855, 1.442695
  %v1859 = vpow.pop %v1858
  %v1860 = vadd.f32 %v1857, 1.0
  %v1861 = vadd.f32 %v1859, 1.0
  %v1862 = vrcp.pop %v1860
  %v1863 = vmul.f32 1.0, %v1862
  %v1864 = vrcp.pop %v1861
  %v1865 = vmul.f32 1.0, %v1864
  %v1866 = vmul.f32 %v1849, %v1727
  %v1867 = vmul.f32 %v1851, %v1728
  %v1868 = vmul.f32 %v1837, %v1852
  %v1869 = vmul.f32 %v1839, %v1853
  %v1870 = vadd.f32 %v1866, %v1868
  %v1871 = vadd.f32 %v1867, %v1869
  %v1872 = vtanh.pop %v1870
  %v1873 = vtanh.pop %v1871
  %v1874 = vmul.f32 %v1863, %v1872
  %v1875 = vmul.f32 %v1865, %v1873
  %1876 = vst [vmem:[#allocation2] sm:$0xff] %v1874
  %1877 = vst [vmem:[#allocation2 + $0x8] sm:$0xff] %v1875
  %1878 = vst [vmem:[#allocation3] sm:$0xff] %v1870
  %1879 = vst [vmem:[#allocation3 + $0x8] sm:$0xff] %v1871
  // Predicated region
  $region30: #{simple_text_classifier.1} parent=0 // pred_check
    %p1880 = pneg %p24
  $region31: #{simple_text_classifier.1} parent=0 // pred_check_branch
    %1882 = sbr.rel (%p1880) target = $region33
  $region32: #{simple_text_classifier.1} parent=0 // pred_region
    %v1883 = vpack.c.bf16 %v1875, %v1874
    %v1884 = vld [vmem:[%s4] sm:$0xf]
    %v1885 = vld [vmem:[%s4 + $0x4] sm:$0xf]
    %v1886 = vld [vmem:[%s4 + $0x8] sm:$0xf]
    %v1887 = vld [vmem:[%s4 + $0xc] sm:$0xf]
    %v1888 = vld [vmem:[%s4 + $0x10] sm:$0xf]
    %v1889 = vld [vmem:[%s4 + $0x14] sm:$0xf]
    %v1890 = vld [vmem:[%s4 + $0x18] sm:$0xf]
    %v1891 = vld [vmem:[%s4 + $0x1c] sm:$0xf]
    %v1892 = vld [vmem:[%s4 + $0x20] sm:$0xf]
    %v1893 = vld [vmem:[%s4 + $0x24] sm:$0xf]
    %v1894 = vld [vmem:[%s4 + $0x28] sm:$0xf]
    %v1895 = vld [vmem:[%s4 + $0x2c] sm:$0xf]
    %v1896 = vld [vmem:[%s4 + $0x30] sm:$0xf]
    %v1897 = vld [vmem:[%s4 + $0x34] sm:$0xf]
    %v1898 = vld [vmem:[%s4 + $0x38] sm:$0xf]
    %v1899 = vld [vmem:[%s4 + $0x3c] sm:$0xf]
    %v1900 = vld [vmem:[%s5] sm:$0x1]
    %v1902 = vlaneseq
    %v1903 = vshrl.u32 %v1902, 7
    %v1904 = vsub.s32 0, %v1903
    %v1905 = vrot.slane %v1900, %v1904
    %v1923 = vunpack.c.l.b16 %v1884
    %v1924 = vunpack.c.l.b16 %v1885
    %v1925 = vunpack.c.l.b16 %v1886
    %v1926 = vunpack.c.l.b16 %v1887
    %v1927 = vunpack.c.l.b16 %v1888
    %v1928 = vunpack.c.l.b16 %v1889
    %v1929 = vunpack.c.l.b16 %v1890
    %v1930 = vunpack.c.l.b16 %v1891
    %v1931 = vunpack.c.l.b16 %v1892
    %v1932 = vunpack.c.l.b16 %v1893
    %v1933 = vunpack.c.l.b16 %v1894
    %v1934 = vunpack.c.l.b16 %v1895
    %v1935 = vunpack.c.l.b16 %v1896
    %v1936 = vunpack.c.l.b16 %v1897
    %v1937 = vunpack.c.l.b16 %v1898
    %v1938 = vunpack.c.l.b16 %v1899
    %v1939 = vpack.c.b16 %v1924, %v1923
    %v1940 = vpack.c.b16 %v1926, %v1925
    %v1941 = vpack.c.b16 %v1928, %v1927
    %v1942 = vpack.c.b16 %v1930, %v1929
    %v1943 = vpack.c.b16 %v1932, %v1931
    %v1944 = vpack.c.b16 %v1934, %v1933
    %v1945 = vpack.c.b16 %v1936, %v1935
    %v1946 = vpack.c.b16 %v1938, %v1937
    %1955 = vmatprep.subr.bf16.mxu0 0
    %1956 = vmatpush1.bf16.msra.mxu0 %v1939
    %1957 = vmatprep.subr.bf16.mxu0 0
    %1958 = vmatpush1.bf16.msra.mxu0 %v1940
    %1959 = vmatprep.subr.bf16.mxu0 0
    %1960 = vmatpush1.bf16.msra.mxu0 %v1941
    %1961 = vmatprep.subr.bf16.mxu0 0
    %1962 = vmatpush1.bf16.msra.mxu0 %v1942
    %1963 = vmatprep.subr.bf16.mxu0 0
    %1964 = vmatpush1.bf16.msra.mxu0 %v1943
    %1965 = vmatprep.subr.bf16.mxu0 0
    %1966 = vmatpush1.bf16.msra.mxu0 %v1944
    %1967 = vmatprep.subr.bf16.mxu0 0
    %1968 = vmatpush1.bf16.msra.mxu0 %v1945
    %1969 = vmatprep.subr.bf16.mxu0 0
    %1970 = vmatpush1.bf16.msra.mxu0 %v1946
    %1971 = vmatprep.subr.bf16.mxu0 0
    %1972 = vmatpush1.bf16.msra.mxu0 0
    %1973 = vmatprep.subr.bf16.mxu0 0
    %1974 = vmatpush1.bf16.msra.mxu0 0
    %1975 = vmatprep.subr.bf16.mxu0 0
    %1976 = vmatpush1.bf16.msra.mxu0 0
    %1977 = vmatprep.subr.bf16.mxu0 0
    %1978 = vmatpush1.bf16.msra.mxu0 0
    %1979 = vmatprep.subr.bf16.mxu0 0
    %1980 = vmatpush1.bf16.msra.mxu0 0
    %1981 = vmatprep.subr.bf16.mxu0 0
    %1982 = vmatpush1.bf16.msra.mxu0 0
    %1983 = vmatprep.subr.bf16.mxu0 0
    %1984 = vmatpush1.bf16.msra.mxu0 0
    %1985 = vmatprep.subr.bf16.mxu0 0
    %1986 = vmatpush1.bf16.msra.mxu0 0
    %1987 = vmatprep.mubr.bf16.mxu0 0
    %1988 = vmatmul.mubr.bf16.gmra.mrb[0].mxu0 %v1883
    %v1989 = vpop.f32.mrb[0].mxu0
    %v1990 = vadd.f32 %v1905, %v1989
    %v1991 = vpop.f32.mrb[0].mxu0
    %v1992 = vpop.f32.mrb[0].mxu0
    %v1993 = vadd.f32 %v1905, %v1992
    %v1994 = vpop.f32.mrb[0].mxu0
    %1995 = vdwg.mxu0
    %1996 = vst [vmem:[%s6] sm:$0xff] %v1990
    %1997 = vst [vmem:[%s6 + $0x8] sm:$0xff] %v1993
  $region33: #{simple_text_classifier.1} parent=0 // pred_fallthru
    _
  // Predicated region
  $region34: #{simple_text_classifier.1} parent=0 // pred_check
    _
  $region35: #{simple_text_classifier.1} parent=0 // pred_check_branch
    %1999 = sbr.rel (0) target = $region37
  $region36: #{simple_text_classifier.1} parent=0 // pred_region
    _
  $region37: #{simple_text_classifier.1} parent=0 // pred_fallthru
    _
  // Predicated region
  $region38: #{simple_text_classifier.1} parent=0 // pred_check
    _
  $region39: #{simple_text_classifier.1} parent=0 // pred_check_branch
    %2001 = sbr.rel (0) target = $region41
  $region40: #{simple_text_classifier.1} parent=0 // pred_region
    _
  $region41: #{simple_text_classifier.1} parent=0 // pred_fallthru
    _

</llo_original>
